<compile_context>
chip_gen: v7x
topology: tpu7x:2x2x1
jax: 0.10.0
libtpu: 0.0.40
codegen_flags: <defaults>
</compile_context>

<pallas_src>
import jax
import jax.numpy as jnp
from jax import lax
from jax.experimental import pallas as pl
from jax.experimental.pallas import tpu as pltpu

BN_EPS = 1e-5


def _banded_weight(w_hwio, wo, pix_stride):
    """Fold a 3x3 HWIO conv weight into 3 lane-banded matrices (one per kernel row dy).

    bw[dy, (x+dx)*pix_stride + ci, x*cout + o] = w[dy, dx, ci, o], so a 3x3 conv over a
    W*C lane-folded, zero-padded image becomes:  out = sum_dy pad[:, dy:dy+ho, :] @ bw[dy].
    pix_stride >= cin lets the folded input carry don't-care lanes between pixels
    (zero weight rows), which is how the max-pool output is consumed without compaction.
    Built once in the wrapper (plain XLA); the kernel never assembles im2col patches.
    """
    kh, kw, cin, cout = w_hwio.shape
    wp = wo + kw - 1
    w_emb = jnp.zeros((kh, kw, pix_stride, cout), w_hwio.dtype).at[:, :, :cin, :].set(w_hwio)
    eye = jnp.eye(wp, dtype=w_hwio.dtype)
    bands = []
    for dy in range(kh):
        b = jnp.zeros((wp, pix_stride, wo, cout), w_hwio.dtype)
        for dx in range(kw):
            shift = eye[:, dx:dx + wo]                        # (wp, wo): 1 at [x+dx, x]
            b = b + jnp.einsum("pq,io->piqo", shift, w_emb[dy, dx])
        bands.append(b.reshape(wp * pix_stride, wo * cout))
    return jnp.stack(bands)                                   # (3, wp*pix_stride, wo*cout)


def _encoder_kernel(x_ref, bw1_ref, g1_ref, b1f_ref, bw2_ref, g2_ref, b2f_ref, s_ref,
                    o_ref, pad1_ref, pad2_ref):
    # x_ref  : (N, Ho, 2, 2*Wo*Cin)  H-pairs on dim 2, W*Cin folded on lanes
    # bw*_ref: (3, K, Wo*Cout) bf16 banded weights; g*: (1, Cout); b*f: (1, Wo*Cout) folded
    # s_ref  : (Wo*Cout, Cout) channel-sum matrix (per-channel BN sums on the MXU)
    # o_ref  : (N*Ho, Wo*Cout) folded output (lane-dense)
    # pad*_ref: zero-halo'd VMEM scratch, interior rows [1:Ho+1]
    n, ho, _, wcin = x_ref.shape
    cout = s_ref.shape[-1]
    f = o_ref.shape[-1]                    # Wo*Cout
    wo = f // cout
    cin = wcin // (2 * wo)
    rows = n * ho                          # matmul M dim
    pixels = rows * wo                     # BN sample count (N*Ho*Wo)
    k1 = pad1_ref.shape[-1]                # (Wo+2) * 2*Cin
    k2 = pad2_ref.shape[-1]                # (Wo+2) * Cout

    # ---- MaxPool2d(2,2): pure element-wise VPU, everything stays on lanes ----
    xv = x_ref[...]
    m = jnp.maximum(xv[:, :, 0, :], xv[:, :, 1, :])                     # H-pair max, (n, ho, 2*wo*cin)
    pw = jnp.maximum(m[:, :, :(2 * wo - 1) * cin], m[:, :, cin:])       # W-pair max
    # pooled pixel x lives at lanes (2x)*cin : (2x)*cin+cin of pw; odd slots are
    # don't-care (finite) and meet zero rows in the banded conv1 weight.

    def conv_bn_relu(pad_ref, bw_ref, g_ref, bf_ref):
        k = pad_ref.shape[-1]
        # 3x3 conv = 3 banded MXU matmuls (bf16 in, f32 accumulate); no im2col copies.
        acc = jnp.zeros((rows, f), jnp.float32)
        for dy in range(3):
            a = pad_ref[:, dy:dy + ho, :].reshape(rows, k).astype(jnp.bfloat16)
            acc = acc + jnp.dot(a, bw_ref[dy], preferred_element_type=jnp.float32)
        # BatchNorm2d (training-mode batch stats), two-pass in f32; channel sums via MXU.
        inv_pix = 1.0 / pixels
        mean = jnp.sum(jnp.dot(acc, s_ref[...], preferred_element_type=jnp.float32),
                       axis=0, keepdims=True) * inv_pix                 # (1, cout)
        mean_f = jnp.concatenate([mean] * wo, axis=-1)                  # fold to (1, wo*cout)
        yc = acc - mean_f
        var = jnp.sum(jnp.dot(yc * yc, s_ref[...], preferred_element_type=jnp.float32),
                      axis=0, keepdims=True) * inv_pix
        scale = g_ref[...] * lax.rsqrt(var + BN_EPS)                    # (1, cout)
        scale_f = jnp.concatenate([scale] * wo, axis=-1)
        return jnp.maximum(yc * scale_f + bf_ref[...], 0.0)             # ReLU, (rows, wo*cout)

    # ---- conv1: zero pad1 halo only, write pooled interior once (pixel stride 2*cin) ----
    pad1_ref[:, 0:1, :] = jnp.zeros((n, 1, k1), jnp.float32)
    pad1_ref[:, ho + 1:ho + 2, :] = jnp.zeros((n, 1, k1), jnp.float32)
    pad1_ref[:, 1:ho + 1, 0:2 * cin] = jnp.zeros((n, ho, 2 * cin), jnp.float32)
    r1 = 2 * cin + (2 * wo - 1) * cin
    pad1_ref[:, 1:ho + 1, r1:] = jnp.zeros((n, ho, k1 - r1), jnp.float32)
    pad1_ref[:, 1:ho + 1, 2 * cin:r1] = pw
    y1 = conv_bn_relu(pad1_ref, bw1_ref, g1_ref, b1f_ref)               # (rows, wo*cout)

    # ---- conv2: y1 is already W*Cout-folded -> store straight into pad2's interior ----
    pad2_ref[:, 0:1, :] = jnp.zeros((n, 1, k2), jnp.float32)
    pad2_ref[:, ho + 1:ho + 2, :] = jnp.zeros((n, 1, k2), jnp.float32)
    pad2_ref[:, 1:ho + 1, 0:cout] = jnp.zeros((n, ho, cout), jnp.float32)
    pad2_ref[:, 1:ho + 1, cout + f:] = jnp.zeros((n, ho, k2 - cout - f), jnp.float32)
    pad2_ref[:, 1:ho + 1, cout:cout + f] = y1.reshape(n, ho, f)
    o_ref[...] = conv_bn_relu(pad2_ref, bw2_ref, g2_ref, b2f_ref)       # lane-dense store


def encoderblock_pallas(x_nhwc, params):
    n, h, w, cin = x_nhwc.shape
    assert h % 2 == 0 and w % 2 == 0, "spatial dims must be even for MaxPool2d(2,2)"
    ho, wo = h // 2, w // 2
    cout = params["w1"].shape[-1]
    f = wo * cout
    rows = n * ho
    k1 = (wo + 2) * 2 * cin
    k2 = (wo + 2) * cout

    x_r = x_nhwc.reshape(n, ho, 2, w * cin)                 # metadata-only reshape
    bw1 = _banded_weight(params["w1"], wo, 2 * cin).astype(jnp.bfloat16)
    bw2 = _banded_weight(params["w2"], wo, cout).astype(jnp.bfloat16)
    g1 = params["g1"].reshape(1, cout)
    g2 = params["g2"].reshape(1, cout)
    b1f = jnp.tile(params["b1"], wo).reshape(1, f)          # beta pre-folded onto lanes
    b2f = jnp.tile(params["b2"], wo).reshape(1, f)
    s = jnp.tile(jnp.eye(cout, dtype=jnp.float32), (wo, 1))  # (wo*cout, cout) channel-sum

    out2d = pl.pallas_call(
        _encoder_kernel,
        out_shape=jax.ShapeDtypeStruct((rows, f), jnp.float32),
        grid=(1,),
        in_specs=[
            pl.BlockSpec((n, ho, 2, w * cin), lambda i: (0, 0, 0, 0)),
            pl.BlockSpec((3, k1, f), lambda i: (0, 0, 0)),
            pl.BlockSpec((1, cout), lambda i: (0, 0)),
            pl.BlockSpec((1, f), lambda i: (0, 0)),
            pl.BlockSpec((3, k2, f), lambda i: (0, 0, 0)),
            pl.BlockSpec((1, cout), lambda i: (0, 0)),
            pl.BlockSpec((1, f), lambda i: (0, 0)),
            pl.BlockSpec((f, cout), lambda i: (0, 0)),
        ],
        out_specs=pl.BlockSpec((rows, f), lambda i: (0, 0)),
        scratch_shapes=[
            pltpu.VMEM((n, ho + 2, k1), jnp.float32),        # padded pooled input (lane-folded)
            pltpu.VMEM((n, ho + 2, k2), jnp.float32),        # padded conv1 activation (lane-folded)
        ],
        compiler_params=pltpu.CompilerParams(dimension_semantics=("arbitrary",)),
    )(x_r, bw1, g1, b1f, bw2, g2, b2f, s)
    return out2d.reshape(n, ho, wo, cout)                    # metadata-only un-fold


def init_params(key, input_n, output_n):
    """Deterministic synthetic parameters (shapes from the module __init__)."""
    k1, k2 = jax.random.split(key)
    return {
        # conv weights in HWIO; PyTorch OIHW weight W[o,i,kh,kw] == w[kh,kw,i,o]
        "w1": 0.1 * jax.random.normal(k1, (3, 3, input_n, output_n), jnp.float32),
        "g1": jnp.ones((output_n,), jnp.float32),
        "b1": jnp.zeros((output_n,), jnp.float32),
        "w2": 0.1 * jax.random.normal(k2, (3, 3, output_n, output_n), jnp.float32),
        "g2": jnp.ones((output_n,), jnp.float32),
        "b2": jnp.zeros((output_n,), jnp.float32),
    }


@jax.jit
def encoderblock_forward(x_nchw, params):
    x = jnp.transpose(x_nchw, (0, 2, 3, 1))          # NCHW -> NHWC (boundary glue)
    y = encoderblock_pallas(x, params)               # fused pool + double conv
    return jnp.transpose(y, (0, 3, 1, 2))            # NHWC -> NCHW


def _reference_forward(x_nchw, params, matmul_dtype=jnp.float32):
    """Pure-JAX reference. matmul_dtype=bfloat16 mirrors the kernel's MXU quantization."""
    cast = lambda a: a.astype(matmul_dtype).astype(jnp.float32)
    x = jnp.transpose(x_nchw, (0, 2, 3, 1))
    x = lax.reduce_window(x, -jnp.inf, lax.max, (1, 2, 2, 1), (1, 2, 2, 1), "VALID")

    def block(x, w, g, b):
        y = lax.conv_general_dilated(cast(x), cast(w), (1, 1), ((1, 1), (1, 1)),
                                     dimension_numbers=("NHWC", "HWIO", "NHWC"))
        mean = jnp.mean(y, axis=(0, 1, 2), keepdims=True)
        var = jnp.mean(jnp.square(y - mean), axis=(0, 1, 2), keepdims=True)
        y = (y - mean) / jnp.sqrt(var + BN_EPS) * g + b
        return jnp.maximum(y, 0.0)

    x = block(x, params["w1"], params["g1"], params["b1"])
    x = block(x, params["w2"], params["g2"], params["b2"])
    return jnp.transpose(x, (0, 3, 1, 2))


if __name__ == "__main__":
    key = jax.random.PRNGKey(0)
    kx, kp = jax.random.split(key)

    # Encoderblock(options, input_n=4, output_n=8), x: NCHW (2, 4, 16, 16)
    x = jax.random.normal(kx, (2, 4, 16, 16), jnp.float32)
    params = init_params(kp, input_n=4, output_n=8)

    out = jax.block_until_ready(encoderblock_forward(x, params))
    assert out.shape == (2, 8, 8, 8), out.shape

    # Tight check vs a reference with MATCHED bf16 quantization of the MXU inputs
    # (catches any layout / banded-weight indexing bug).
    ref_bf16 = _reference_forward(x, params, jnp.bfloat16)
    err = float(jnp.max(jnp.abs(out - ref_bf16)))
    assert err < 3e-3, f"max abs error vs bf16-matched reference: {err}"

    # Sanity check vs the full-f32 reference (difference bounded by the intentional
    # bf16 cast of conv inputs/weights; BN renormalizes).
    ref_f32 = _reference_forward(x, params)
    err32 = float(jnp.max(jnp.abs(out - ref_f32)))
    assert err32 < 1e-1, f"max abs error vs f32 reference: {err32}"

    print("KERNEL_OK")
</pallas_src>

<mosaic_0001>
module attributes {stable_mosaic.version = 11 : i64} {
  func.func @_encoder_kernel(%arg0: i32, %arg1: memref<2x8x2x64xf32, #tpu.memory_space<vmem>>, %arg2: memref<3x80x64xbf16, #tpu.memory_space<vmem>>, %arg3: memref<1x8xf32, #tpu.memory_space<vmem>>, %arg4: memref<1x64xf32, #tpu.memory_space<vmem>>, %arg5: memref<3x80x64xbf16, #tpu.memory_space<vmem>>, %arg6: memref<1x8xf32, #tpu.memory_space<vmem>>, %arg7: memref<1x64xf32, #tpu.memory_space<vmem>>, %arg8: memref<64x8xf32, #tpu.memory_space<vmem>>, %arg9: memref<16x64xf32, #tpu.memory_space<vmem>>, %arg10: memref<2x10x80xf32, #tpu.memory_space<vmem>>, %arg11: memref<2x10x80xf32, #tpu.memory_space<vmem>>) attributes {dimension_semantics = [#tpu.dimension_semantics<arbitrary>], iteration_bounds = array<i64: 1>, scalar_prefetch = 0 : i64, scratch_operands = 2 : i64, tpu.core_type = #tpu.core_type<tc>, window_params = [{pipeline_mode = #tpu.pipeline_mode<synchronous>, transform_indices = @transform_0, window_bounds = array<i64: 2, 8, 2, 64>}, {pipeline_mode = #tpu.pipeline_mode<synchronous>, transform_indices = @transform_1, window_bounds = array<i64: 3, 80, 64>}, {pipeline_mode = #tpu.pipeline_mode<synchronous>, transform_indices = @transform_2, window_bounds = array<i64: 1, 8>}, {pipeline_mode = #tpu.pipeline_mode<synchronous>, transform_indices = @transform_3, window_bounds = array<i64: 1, 64>}, {pipeline_mode = #tpu.pipeline_mode<synchronous>, transform_indices = @transform_4, window_bounds = array<i64: 3, 80, 64>}, {pipeline_mode = #tpu.pipeline_mode<synchronous>, transform_indices = @transform_5, window_bounds = array<i64: 1, 8>}, {pipeline_mode = #tpu.pipeline_mode<synchronous>, transform_indices = @transform_6, window_bounds = array<i64: 1, 64>}, {pipeline_mode = #tpu.pipeline_mode<synchronous>, transform_indices = @transform_7, window_bounds = array<i64: 64, 8>}, {pipeline_mode = #tpu.pipeline_mode<synchronous>, transform_indices = @transform_8, window_bounds = array<i64: 16, 64>}]} {
    %c0 = arith.constant 0 : index
    %c0_0 = arith.constant 0 : index
    %c0_1 = arith.constant 0 : index
    %c0_2 = arith.constant 0 : index
    %0 = vector.load %arg1[%c0, %c0_0, %c0_1, %c0_2] : memref<2x8x2x64xf32, #tpu.memory_space<vmem>>, vector<2x8x2x64xf32>
    %1 = vector.extract_strided_slice %0 {offsets = [0, 0, 0, 0], sizes = [2, 8, 1, 64], strides = [1, 1, 1, 1]} : vector<2x8x2x64xf32> to vector<2x8x1x64xf32>
    %2 = vector.shape_cast %1 : vector<2x8x1x64xf32> to vector<2x8x64xf32>
    %3 = vector.extract_strided_slice %0 {offsets = [0, 0, 1, 0], sizes = [2, 8, 1, 64], strides = [1, 1, 1, 1]} : vector<2x8x2x64xf32> to vector<2x8x1x64xf32>
    %4 = vector.shape_cast %3 : vector<2x8x1x64xf32> to vector<2x8x64xf32>
    %5 = arith.maximumf %2, %4 : vector<2x8x64xf32>
    %6 = vector.extract_strided_slice %5 {offsets = [0, 0, 0], sizes = [2, 8, 60], strides = [1, 1, 1]} : vector<2x8x64xf32> to vector<2x8x60xf32>
    %7 = vector.extract_strided_slice %5 {offsets = [0, 0, 4], sizes = [2, 8, 60], strides = [1, 1, 1]} : vector<2x8x64xf32> to vector<2x8x60xf32>
    %8 = arith.maximumf %6, %7 : vector<2x8x60xf32>
    %cst = arith.constant 0.000000e+00 : f32
    %9 = vector.broadcast %cst : f32 to vector<2x1x80xf32>
    %c0_3 = arith.constant 0 : index
    %c0_4 = arith.constant 0 : index
    %c0_5 = arith.constant 0 : index
    %10 = vector.load %arg10[%c0_3, %c0_4, %c0_5] : memref<2x10x80xf32, #tpu.memory_space<vmem>>, vector<2x1x80xf32>
    tpu.vector_store %arg10[%c0_3, %c0_4, %c0_5], %9 {strides = array<i32>} : memref<2x10x80xf32, #tpu.memory_space<vmem>>, vector<2x1x80xf32>,
    %cst_6 = arith.constant 0.000000e+00 : f32
    %11 = vector.broadcast %cst_6 : f32 to vector<2x1x80xf32>
    %c0_7 = arith.constant 0 : index
    %c9 = arith.constant 9 : index
    %c0_8 = arith.constant 0 : index
    %12 = vector.load %arg10[%c0_7, %c9, %c0_8] : memref<2x10x80xf32, #tpu.memory_space<vmem>>, vector<2x1x80xf32>
    tpu.vector_store %arg10[%c0_7, %c9, %c0_8], %11 {strides = array<i32>} : memref<2x10x80xf32, #tpu.memory_space<vmem>>, vector<2x1x80xf32>,
    %cst_9 = arith.constant 0.000000e+00 : f32
    %13 = vector.broadcast %cst_9 : f32 to vector<2x8x8xf32>
    %c0_10 = arith.constant 0 : index
    %c1 = arith.constant 1 : index
    %c0_11 = arith.constant 0 : index
    %14 = vector.load %arg10[%c0_10, %c1, %c0_11] : memref<2x10x80xf32, #tpu.memory_space<vmem>>, vector<2x8x8xf32>
    tpu.vector_store %arg10[%c0_10, %c1, %c0_11], %13 {strides = array<i32>} : memref<2x10x80xf32, #tpu.memory_space<vmem>>, vector<2x8x8xf32>,
    %cst_12 = arith.constant 0.000000e+00 : f32
    %15 = vector.broadcast %cst_12 : f32 to vector<2x8x12xf32>
    %c0_13 = arith.constant 0 : index
    %c1_14 = arith.constant 1 : index
    %c68 = arith.constant 68 : index
    %16 = vector.load %arg10[%c0_13, %c1_14, %c68] : memref<2x10x80xf32, #tpu.memory_space<vmem>>, vector<2x8x12xf32>
    tpu.vector_store %arg10[%c0_13, %c1_14, %c68], %15 {strides = array<i32>} : memref<2x10x80xf32, #tpu.memory_space<vmem>>, vector<2x8x12xf32>,
    %c0_15 = arith.constant 0 : index
    %c1_16 = arith.constant 1 : index
    %c8 = arith.constant 8 : index
    %17 = vector.load %arg10[%c0_15, %c1_16, %c8] : memref<2x10x80xf32, #tpu.memory_space<vmem>>, vector<2x8x60xf32>
    tpu.vector_store %arg10[%c0_15, %c1_16, %c8], %8 {strides = array<i32>} : memref<2x10x80xf32, #tpu.memory_space<vmem>>, vector<2x8x60xf32>,
    %cst_17 = arith.constant 0.000000e+00 : f32
    %18 = vector.broadcast %cst_17 : f32 to vector<16x64xf32>
    %c0_18 = arith.constant 0 : index
    %c0_19 = arith.constant 0 : index
    %c0_20 = arith.constant 0 : index
    %19 = vector.load %arg10[%c0_18, %c0_19, %c0_20] : memref<2x10x80xf32, #tpu.memory_space<vmem>>, vector<2x8x80xf32>
    %20 = vector.shape_cast %19 : vector<2x8x80xf32> to vector<16x80xf32>
    %21 = arith.truncf %20 : vector<16x80xf32> to vector<16x80xbf16>
    %c0_21 = arith.constant 0 : index
    %c0_22 = arith.constant 0 : index
    %c0_23 = arith.constant 0 : index
    %22 = vector.load %arg2[%c0_21, %c0_22, %c0_23] : memref<3x80x64xbf16, #tpu.memory_space<vmem>>, vector<1x80x64xbf16>
    %23 = vector.shape_cast %22 : vector<1x80x64xbf16> to vector<80x64xbf16>
    %cst_24 = arith.constant dense<0.000000e+00> : vector<16x64xf32>
    %24 = tpu.matmul %21, %23, %cst_24 {dimension_numbers = #tpu.dot_dimension_numbers<[1], [0], [0], [1], [0, 0, 1, 1], [], []>} : vector<16x80xbf16>, vector<80x64xbf16>, vector<16x64xf32> -> vector<16x64xf32>
    %25 = arith.addf %18, %24 : vector<16x64xf32>
    %c0_25 = arith.constant 0 : index
    %c1_26 = arith.constant 1 : index
    %c0_27 = arith.constant 0 : index
    %26 = vector.load %arg10[%c0_25, %c1_26, %c0_27] : memref<2x10x80xf32, #tpu.memory_space<vmem>>, vector<2x8x80xf32>
    %27 = vector.shape_cast %26 : vector<2x8x80xf32> to vector<16x80xf32>
    %28 = arith.truncf %27 : vector<16x80xf32> to vector<16x80xbf16>
    %c1_28 = arith.constant 1 : index
    %c0_29 = arith.constant 0 : index
    %c0_30 = arith.constant 0 : index
    %29 = vector.load %arg2[%c1_28, %c0_29, %c0_30] : memref<3x80x64xbf16, #tpu.memory_space<vmem>>, vector<1x80x64xbf16>
    %30 = vector.shape_cast %29 : vector<1x80x64xbf16> to vector<80x64xbf16>
    %cst_31 = arith.constant dense<0.000000e+00> : vector<16x64xf32>
    %31 = tpu.matmul %28, %30, %cst_31 {dimension_numbers = #tpu.dot_dimension_numbers<[1], [0], [0], [1], [0, 0, 1, 1], [], []>} : vector<16x80xbf16>, vector<80x64xbf16>, vector<16x64xf32> -> vector<16x64xf32>
    %32 = arith.addf %25, %31 : vector<16x64xf32>
    %c0_32 = arith.constant 0 : index
    %c2 = arith.constant 2 : index
    %c0_33 = arith.constant 0 : index
    %33 = vector.load %arg10[%c0_32, %c2, %c0_33] : memref<2x10x80xf32, #tpu.memory_space<vmem>>, vector<2x8x80xf32>
    %34 = vector.shape_cast %33 : vector<2x8x80xf32> to vector<16x80xf32>
    %35 = arith.truncf %34 : vector<16x80xf32> to vector<16x80xbf16>
    %c2_34 = arith.constant 2 : index
    %c0_35 = arith.constant 0 : index
    %c0_36 = arith.constant 0 : index
    %36 = vector.load %arg2[%c2_34, %c0_35, %c0_36] : memref<3x80x64xbf16, #tpu.memory_space<vmem>>, vector<1x80x64xbf16>
    %37 = vector.shape_cast %36 : vector<1x80x64xbf16> to vector<80x64xbf16>
    %cst_37 = arith.constant dense<0.000000e+00> : vector<16x64xf32>
    %38 = tpu.matmul %35, %37, %cst_37 {dimension_numbers = #tpu.dot_dimension_numbers<[1], [0], [0], [1], [0, 0, 1, 1], [], []>} : vector<16x80xbf16>, vector<80x64xbf16>, vector<16x64xf32> -> vector<16x64xf32>
    %39 = arith.addf %32, %38 : vector<16x64xf32>
    %c0_38 = arith.constant 0 : index
    %c0_39 = arith.constant 0 : index
    %40 = vector.load %arg8[%c0_38, %c0_39] : memref<64x8xf32, #tpu.memory_space<vmem>>, vector<64x8xf32>
    %cst_40 = arith.constant dense<0.000000e+00> : vector<16x8xf32>
    %41 = tpu.matmul %39, %40, %cst_40 {dimension_numbers = #tpu.dot_dimension_numbers<[1], [0], [0], [1], [0, 0, 1, 1], [], []>} : vector<16x64xf32>, vector<64x8xf32>, vector<16x8xf32> -> vector<16x8xf32>
    %cst_41 = arith.constant dense<0.000000e+00> : vector<8xf32>
    %42 = vector.multi_reduction <add>, %41, %cst_41 [0] : vector<16x8xf32> to vector<8xf32>
    %43 = vector.shape_cast %42 : vector<8xf32> to vector<1x8xf32>
    %cst_42 = arith.constant 7.812500e-03 : f32
    %44 = vector.broadcast %cst_42 : f32 to vector<1x8xf32>
    %45 = arith.mulf %43, %44 : vector<1x8xf32>
    %46 = tpu.concatenate %45, %45, %45, %45, %45, %45, %45, %45 in 1 : vector<1x8xf32>, vector<1x8xf32>, vector<1x8xf32>, vector<1x8xf32>, vector<1x8xf32>, vector<1x8xf32>, vector<1x8xf32>, vector<1x8xf32> -> vector<1x64xf32>
    %47 = vector.broadcast %46 : vector<1x64xf32> to vector<16x64xf32>
    %48 = arith.subf %39, %47 : vector<16x64xf32>
    %49 = arith.mulf %48, %48 : vector<16x64xf32>
    %c0_43 = arith.constant 0 : index
    %c0_44 = arith.constant 0 : index
    %50 = vector.load %arg8[%c0_43, %c0_44] : memref<64x8xf32, #tpu.memory_space<vmem>>, vector<64x8xf32>
    %cst_45 = arith.constant dense<0.000000e+00> : vector<16x8xf32>
    %51 = tpu.matmul %49, %50, %cst_45 {dimension_numbers = #tpu.dot_dimension_numbers<[1], [0], [0], [1], [0, 0, 1, 1], [], []>} : vector<16x64xf32>, vector<64x8xf32>, vector<16x8xf32> -> vector<16x8xf32>
    %cst_46 = arith.constant dense<0.000000e+00> : vector<8xf32>
    %52 = vector.multi_reduction <add>, %51, %cst_46 [0] : vector<16x8xf32> to vector<8xf32>
    %53 = vector.shape_cast %52 : vector<8xf32> to vector<1x8xf32>
    %cst_47 = arith.constant 7.812500e-03 : f32
    %54 = vector.broadcast %cst_47 : f32 to vector<1x8xf32>
    %55 = arith.mulf %53, %54 : vector<1x8xf32>
    %c0_48 = arith.constant 0 : index
    %c0_49 = arith.constant 0 : index
    %56 = vector.load %arg3[%c0_48, %c0_49] : memref<1x8xf32, #tpu.memory_space<vmem>>, vector<1x8xf32>
    %cst_50 = arith.constant 9.99999974E-6 : f32
    %57 = vector.broadcast %cst_50 : f32 to vector<1x8xf32>
    %58 = arith.addf %55, %57 : vector<1x8xf32>
    %59 = math.rsqrt %58 : vector<1x8xf32>
    %60 = arith.mulf %56, %59 : vector<1x8xf32>
    %61 = tpu.concatenate %60, %60, %60, %60, %60, %60, %60, %60 in 1 : vector<1x8xf32>, vector<1x8xf32>, vector<1x8xf32>, vector<1x8xf32>, vector<1x8xf32>, vector<1x8xf32>, vector<1x8xf32>, vector<1x8xf32> -> vector<1x64xf32>
    %62 = vector.broadcast %61 : vector<1x64xf32> to vector<16x64xf32>
    %63 = arith.mulf %48, %62 : vector<16x64xf32>
    %c0_51 = arith.constant 0 : index
    %c0_52 = arith.constant 0 : index
    %64 = vector.load %arg4[%c0_51, %c0_52] : memref<1x64xf32, #tpu.memory_space<vmem>>, vector<1x64xf32>
    %65 = vector.broadcast %64 : vector<1x64xf32> to vector<16x64xf32>
    %66 = arith.addf %63, %65 : vector<16x64xf32>
    %cst_53 = arith.constant 0.000000e+00 : f32
    %67 = vector.broadcast %cst_53 : f32 to vector<16x64xf32>
    %68 = arith.maximumf %66, %67 : vector<16x64xf32>
    %cst_54 = arith.constant 0.000000e+00 : f32
    %69 = vector.broadcast %cst_54 : f32 to vector<2x1x80xf32>
    %c0_55 = arith.constant 0 : index
    %c0_56 = arith.constant 0 : index
    %c0_57 = arith.constant 0 : index
    %70 = vector.load %arg11[%c0_55, %c0_56, %c0_57] : memref<2x10x80xf32, #tpu.memory_space<vmem>>, vector<2x1x80xf32>
    tpu.vector_store %arg11[%c0_55, %c0_56, %c0_57], %69 {strides = array<i32>} : memref<2x10x80xf32, #tpu.memory_space<vmem>>, vector<2x1x80xf32>,
    %cst_58 = arith.constant 0.000000e+00 : f32
    %71 = vector.broadcast %cst_58 : f32 to vector<2x1x80xf32>
    %c0_59 = arith.constant 0 : index
    %c9_60 = arith.constant 9 : index
    %c0_61 = arith.constant 0 : index
    %72 = vector.load %arg11[%c0_59, %c9_60, %c0_61] : memref<2x10x80xf32, #tpu.memory_space<vmem>>, vector<2x1x80xf32>
    tpu.vector_store %arg11[%c0_59, %c9_60, %c0_61], %71 {strides = array<i32>} : memref<2x10x80xf32, #tpu.memory_space<vmem>>, vector<2x1x80xf32>,
    %cst_62 = arith.constant 0.000000e+00 : f32
    %73 = vector.broadcast %cst_62 : f32 to vector<2x8x8xf32>
    %c0_63 = arith.constant 0 : index
    %c1_64 = arith.constant 1 : index
    %c0_65 = arith.constant 0 : index
    %74 = vector.load %arg11[%c0_63, %c1_64, %c0_65] : memref<2x10x80xf32, #tpu.memory_space<vmem>>, vector<2x8x8xf32>
    tpu.vector_store %arg11[%c0_63, %c1_64, %c0_65], %73 {strides = array<i32>} : memref<2x10x80xf32, #tpu.memory_space<vmem>>, vector<2x8x8xf32>,
    %cst_66 = arith.constant 0.000000e+00 : f32
    %75 = vector.broadcast %cst_66 : f32 to vector<2x8x8xf32>
    %c0_67 = arith.constant 0 : index
    %c1_68 = arith.constant 1 : index
    %c72 = arith.constant 72 : index
    %76 = vector.load %arg11[%c0_67, %c1_68, %c72] : memref<2x10x80xf32, #tpu.memory_space<vmem>>, vector<2x8x8xf32>
    tpu.vector_store %arg11[%c0_67, %c1_68, %c72], %75 {strides = array<i32>} : memref<2x10x80xf32, #tpu.memory_space<vmem>>, vector<2x8x8xf32>,
    %77 = vector.shape_cast %68 : vector<16x64xf32> to vector<2x8x64xf32>
    %c0_69 = arith.constant 0 : index
    %c1_70 = arith.constant 1 : index
    %c8_71 = arith.constant 8 : index
    %78 = vector.load %arg11[%c0_69, %c1_70, %c8_71] : memref<2x10x80xf32, #tpu.memory_space<vmem>>, vector<2x8x64xf32>
    tpu.vector_store %arg11[%c0_69, %c1_70, %c8_71], %77 {strides = array<i32>} : memref<2x10x80xf32, #tpu.memory_space<vmem>>, vector<2x8x64xf32>,
    %cst_72 = arith.constant 0.000000e+00 : f32
    %79 = vector.broadcast %cst_72 : f32 to vector<16x64xf32>
    %c0_73 = arith.constant 0 : index
    %c0_74 = arith.constant 0 : index
    %c0_75 = arith.constant 0 : index
    %80 = vector.load %arg11[%c0_73, %c0_74, %c0_75] : memref<2x10x80xf32, #tpu.memory_space<vmem>>, vector<2x8x80xf32>
    %81 = vector.shape_cast %80 : vector<2x8x80xf32> to vector<16x80xf32>
    %82 = arith.truncf %81 : vector<16x80xf32> to vector<16x80xbf16>
    %c0_76 = arith.constant 0 : index
    %c0_77 = arith.constant 0 : index
    %c0_78 = arith.constant 0 : index
    %83 = vector.load %arg5[%c0_76, %c0_77, %c0_78] : memref<3x80x64xbf16, #tpu.memory_space<vmem>>, vector<1x80x64xbf16>
    %84 = vector.shape_cast %83 : vector<1x80x64xbf16> to vector<80x64xbf16>
    %cst_79 = arith.constant dense<0.000000e+00> : vector<16x64xf32>
    %85 = tpu.matmul %82, %84, %cst_79 {dimension_numbers = #tpu.dot_dimension_numbers<[1], [0], [0], [1], [0, 0, 1, 1], [], []>} : vector<16x80xbf16>, vector<80x64xbf16>, vector<16x64xf32> -> vector<16x64xf32>
    %86 = arith.addf %79, %85 : vector<16x64xf32>
    %c0_80 = arith.constant 0 : index
    %c1_81 = arith.constant 1 : index
    %c0_82 = arith.constant 0 : index
    %87 = vector.load %arg11[%c0_80, %c1_81, %c0_82] : memref<2x10x80xf32, #tpu.memory_space<vmem>>, vector<2x8x80xf32>
    %88 = vector.shape_cast %87 : vector<2x8x80xf32> to vector<16x80xf32>
    %89 = arith.truncf %88 : vector<16x80xf32> to vector<16x80xbf16>
    %c1_83 = arith.constant 1 : index
    %c0_84 = arith.constant 0 : index
    %c0_85 = arith.constant 0 : index
    %90 = vector.load %arg5[%c1_83, %c0_84, %c0_85] : memref<3x80x64xbf16, #tpu.memory_space<vmem>>, vector<1x80x64xbf16>
    %91 = vector.shape_cast %90 : vector<1x80x64xbf16> to vector<80x64xbf16>
    %cst_86 = arith.constant dense<0.000000e+00> : vector<16x64xf32>
    %92 = tpu.matmul %89, %91, %cst_86 {dimension_numbers = #tpu.dot_dimension_numbers<[1], [0], [0], [1], [0, 0, 1, 1], [], []>} : vector<16x80xbf16>, vector<80x64xbf16>, vector<16x64xf32> -> vector<16x64xf32>
    %93 = arith.addf %86, %92 : vector<16x64xf32>
    %c0_87 = arith.constant 0 : index
    %c2_88 = arith.constant 2 : index
    %c0_89 = arith.constant 0 : index
    %94 = vector.load %arg11[%c0_87, %c2_88, %c0_89] : memref<2x10x80xf32, #tpu.memory_space<vmem>>, vector<2x8x80xf32>
    %95 = vector.shape_cast %94 : vector<2x8x80xf32> to vector<16x80xf32>
    %96 = arith.truncf %95 : vector<16x80xf32> to vector<16x80xbf16>
    %c2_90 = arith.constant 2 : index
    %c0_91 = arith.constant 0 : index
    %c0_92 = arith.constant 0 : index
    %97 = vector.load %arg5[%c2_90, %c0_91, %c0_92] : memref<3x80x64xbf16, #tpu.memory_space<vmem>>, vector<1x80x64xbf16>
    %98 = vector.shape_cast %97 : vector<1x80x64xbf16> to vector<80x64xbf16>
    %cst_93 = arith.constant dense<0.000000e+00> : vector<16x64xf32>
    %99 = tpu.matmul %96, %98, %cst_93 {dimension_numbers = #tpu.dot_dimension_numbers<[1], [0], [0], [1], [0, 0, 1, 1], [], []>} : vector<16x80xbf16>, vector<80x64xbf16>, vector<16x64xf32> -> vector<16x64xf32>
    %100 = arith.addf %93, %99 : vector<16x64xf32>
    %c0_94 = arith.constant 0 : index
    %c0_95 = arith.constant 0 : index
    %101 = vector.load %arg8[%c0_94, %c0_95] : memref<64x8xf32, #tpu.memory_space<vmem>>, vector<64x8xf32>
    %cst_96 = arith.constant dense<0.000000e+00> : vector<16x8xf32>
    %102 = tpu.matmul %100, %101, %cst_96 {dimension_numbers = #tpu.dot_dimension_numbers<[1], [0], [0], [1], [0, 0, 1, 1], [], []>} : vector<16x64xf32>, vector<64x8xf32>, vector<16x8xf32> -> vector<16x8xf32>
    %cst_97 = arith.constant dense<0.000000e+00> : vector<8xf32>
    %103 = vector.multi_reduction <add>, %102, %cst_97 [0] : vector<16x8xf32> to vector<8xf32>
    %104 = vector.shape_cast %103 : vector<8xf32> to vector<1x8xf32>
    %cst_98 = arith.constant 7.812500e-03 : f32
    %105 = vector.broadcast %cst_98 : f32 to vector<1x8xf32>
    %106 = arith.mulf %104, %105 : vector<1x8xf32>
    %107 = tpu.concatenate %106, %106, %106, %106, %106, %106, %106, %106 in 1 : vector<1x8xf32>, vector<1x8xf32>, vector<1x8xf32>, vector<1x8xf32>, vector<1x8xf32>, vector<1x8xf32>, vector<1x8xf32>, vector<1x8xf32> -> vector<1x64xf32>
    %108 = vector.broadcast %107 : vector<1x64xf32> to vector<16x64xf32>
    %109 = arith.subf %100, %108 : vector<16x64xf32>
    %110 = arith.mulf %109, %109 : vector<16x64xf32>
    %c0_99 = arith.constant 0 : index
    %c0_100 = arith.constant 0 : index
    %111 = vector.load %arg8[%c0_99, %c0_100] : memref<64x8xf32, #tpu.memory_space<vmem>>, vector<64x8xf32>
    %cst_101 = arith.constant dense<0.000000e+00> : vector<16x8xf32>
    %112 = tpu.matmul %110, %111, %cst_101 {dimension_numbers = #tpu.dot_dimension_numbers<[1], [0], [0], [1], [0, 0, 1, 1], [], []>} : vector<16x64xf32>, vector<64x8xf32>, vector<16x8xf32> -> vector<16x8xf32>
    %cst_102 = arith.constant dense<0.000000e+00> : vector<8xf32>
    %113 = vector.multi_reduction <add>, %112, %cst_102 [0] : vector<16x8xf32> to vector<8xf32>
    %114 = vector.shape_cast %113 : vector<8xf32> to vector<1x8xf32>
    %cst_103 = arith.constant 7.812500e-03 : f32
    %115 = vector.broadcast %cst_103 : f32 to vector<1x8xf32>
    %116 = arith.mulf %114, %115 : vector<1x8xf32>
    %c0_104 = arith.constant 0 : index
    %c0_105 = arith.constant 0 : index
    %117 = vector.load %arg6[%c0_104, %c0_105] : memref<1x8xf32, #tpu.memory_space<vmem>>, vector<1x8xf32>
    %cst_106 = arith.constant 9.99999974E-6 : f32
    %118 = vector.broadcast %cst_106 : f32 to vector<1x8xf32>
    %119 = arith.addf %116, %118 : vector<1x8xf32>
    %120 = math.rsqrt %119 : vector<1x8xf32>
    %121 = arith.mulf %117, %120 : vector<1x8xf32>
    %122 = tpu.concatenate %121, %121, %121, %121, %121, %121, %121, %121 in 1 : vector<1x8xf32>, vector<1x8xf32>, vector<1x8xf32>, vector<1x8xf32>, vector<1x8xf32>, vector<1x8xf32>, vector<1x8xf32>, vector<1x8xf32> -> vector<1x64xf32>
    %123 = vector.broadcast %122 : vector<1x64xf32> to vector<16x64xf32>
    %124 = arith.mulf %109, %123 : vector<16x64xf32>
    %c0_107 = arith.constant 0 : index
    %c0_108 = arith.constant 0 : index
    %125 = vector.load %arg7[%c0_107, %c0_108] : memref<1x64xf32, #tpu.memory_space<vmem>>, vector<1x64xf32>
    %126 = vector.broadcast %125 : vector<1x64xf32> to vector<16x64xf32>
    %127 = arith.addf %124, %126 : vector<16x64xf32>
    %cst_109 = arith.constant 0.000000e+00 : f32
    %128 = vector.broadcast %cst_109 : f32 to vector<16x64xf32>
    %129 = arith.maximumf %127, %128 : vector<16x64xf32>
    %c0_110 = arith.constant 0 : index
    %c0_111 = arith.constant 0 : index
    %130 = vector.load %arg9[%c0_110, %c0_111] : memref<16x64xf32, #tpu.memory_space<vmem>>, vector<16x64xf32>
    tpu.vector_store %arg9[%c0_110, %c0_111], %129 {strides = array<i32>} : memref<16x64xf32, #tpu.memory_space<vmem>>, vector<16x64xf32>,
    return
  }
  func.func @transform_0(%arg0: i32) -> (i32, i32, i32, i32) {
    %c0_i32 = arith.constant 0 : i32
    %c0_i32_0 = arith.constant 0 : i32
    %c0_i32_1 = arith.constant 0 : i32
    %c0_i32_2 = arith.constant 0 : i32
    %c0_i32_3 = arith.constant 0 : i32
    return %c0_i32, %c0_i32_0, %c0_i32_1, %c0_i32_2 : i32, i32, i32, i32
  }
  func.func @transform_1(%arg0: i32) -> (i32, i32, i32) {
    %c0_i32 = arith.constant 0 : i32
    %c0_i32_0 = arith.constant 0 : i32
    %c0_i32_1 = arith.constant 0 : i32
    %c0_i32_2 = arith.constant 0 : i32
    return %c0_i32, %c0_i32_0, %c0_i32_1 : i32, i32, i32
  }
  func.func @transform_2(%arg0: i32) -> (i32, i32) {
    %c0_i32 = arith.constant 0 : i32
    %c0_i32_0 = arith.constant 0 : i32
    %c0_i32_1 = arith.constant 0 : i32
    return %c0_i32, %c0_i32_0 : i32, i32
  }
  func.func @transform_3(%arg0: i32) -> (i32, i32) {
    %c0_i32 = arith.constant 0 : i32
    %c0_i32_0 = arith.constant 0 : i32
    %c0_i32_1 = arith.constant 0 : i32
    return %c0_i32, %c0_i32_0 : i32, i32
  }
  func.func @transform_4(%arg0: i32) -> (i32, i32, i32) {
    %c0_i32 = arith.constant 0 : i32
    %c0_i32_0 = arith.constant 0 : i32
    %c0_i32_1 = arith.constant 0 : i32
    %c0_i32_2 = arith.constant 0 : i32
    return %c0_i32, %c0_i32_0, %c0_i32_1 : i32, i32, i32
  }
  func.func @transform_5(%arg0: i32) -> (i32, i32) {
    %c0_i32 = arith.constant 0 : i32
    %c0_i32_0 = arith.constant 0 : i32
    %c0_i32_1 = arith.constant 0 : i32
    return %c0_i32, %c0_i32_0 : i32, i32
  }
  func.func @transform_6(%arg0: i32) -> (i32, i32) {
    %c0_i32 = arith.constant 0 : i32
    %c0_i32_0 = arith.constant 0 : i32
    %c0_i32_1 = arith.constant 0 : i32
    return %c0_i32, %c0_i32_0 : i32, i32
  }
  func.func @transform_7(%arg0: i32) -> (i32, i32) {
    %c0_i32 = arith.constant 0 : i32
    %c0_i32_0 = arith.constant 0 : i32
    %c0_i32_1 = arith.constant 0 : i32
    return %c0_i32, %c0_i32_0 : i32, i32
  }
  func.func @transform_8(%arg0: i32) -> (i32, i32) {
    %c0_i32 = arith.constant 0 : i32
    %c0_i32_0 = arith.constant 0 : i32
    %c0_i32_1 = arith.constant 0 : i32
    return %c0_i32, %c0_i32_0 : i32, i32
  }
}

</mosaic_0001>

<llo_original>
// kernel: tile.18
$region0: #{tile.18}
  #allocation0 [shape = 's32[1]{0}', space=sflag, size = 0x4, scoped, tag = 'scoped memory for tile.18']
  %s0 = inlined_call_operand.vmem [shape: f32[8], index: 0, kind: input, shape index: {}]
  %s1 = inlined_call_operand.vmem [shape: f32[8,8], index: 1, kind: output, shape index: {}]
  // Predicated region
  $region2: #{tile.18} parent=0 // pred_check
    _
  $region3: #{tile.18} parent=0 // pred_check_branch
    %3 = sbr.rel (0) target = $region5
  $region4: #{tile.18} parent=0 // pred_region
    _
  $region5: #{tile.18} parent=0 // pred_fallthru
    _
  %v4 = vld [vmem:[%s0] ss:$0 sm:$0xff]
  %5 = vst [vmem:[%s1] sm:$0xff] %v4

// kernel: tile.19
$region0: #{tile.19}
  %s0 = inlined_call_operand.vmem [shape: f32[8,8], index: 0, kind: input, shape index: {}]
  %s1 = inlined_call_operand.vmem [shape: f32[1,64], index: 1, kind: output, shape index: {}]
  $region1: #{tile.19} parent=0
    #allocation0 [shape = 'u8[4096]{0}', space=vmem, size = 0x1000, scoped, tag = 'scoped mem for output reshape']
    %v2 = vld [vmem:[%s0] sm:$0x1]
    %vm3 = vcmask 64512
    %4 = vst.msk [vmem:[#allocation0] sm:$0x1] %vm3, %v2
    %s5 = scalar_lea.vmem %s0, 7
    %v6 = vld [vmem:[%s5] sm:$0x1]
    %7 = vrot.lane.b32.xlu0 %v6, 56
    %v8 = vpop.permute.xlu0 %7
    %vm9 = vcmask 523712
    %10 = vst.msk [vmem:[#allocation0] sm:$0x1] %vm9, %v8
    %s11 = scalar_lea.vmem %s0, 6
    %v12 = vld [vmem:[%s11] sm:$0x1]
    %13 = vrot.lane.b32.xlu0 %v12, 48
    %v14 = vpop.permute.xlu0 %13
    %vm15 = vcmask 458112
    %16 = vst.msk [vmem:[#allocation0] sm:$0x1] %vm15, %v14
    %s17 = scalar_lea.vmem %s0, 5
    %v18 = vld [vmem:[%s17] sm:$0x1]
    %19 = vrot.lane.b32.xlu0 %v18, 40
    %v20 = vpop.permute.xlu0 %19
    %vm21 = vcmask 392512
    %22 = vst.msk [vmem:[#allocation0] sm:$0x1] %vm21, %v20
    %s23 = scalar_lea.vmem %s0, 4
    %v24 = vld [vmem:[%s23] sm:$0x1]
    %25 = vrot.lane.b32.xlu0 %v24, 32
    %v26 = vpop.permute.xlu0 %25
    %vm27 = vcmask 326912
    %28 = vst.msk [vmem:[#allocation0] sm:$0x1] %vm27, %v26
    %s29 = scalar_lea.vmem %s0, 3
    %v30 = vld [vmem:[%s29] sm:$0x1]
    %31 = vrot.lane.b32.xlu0 %v30, 24
    %v32 = vpop.permute.xlu0 %31
    %vm33 = vcmask 261312
    %34 = vst.msk [vmem:[#allocation0] sm:$0x1] %vm33, %v32
    %s35 = scalar_lea.vmem %s0, 2
    %v36 = vld [vmem:[%s35] sm:$0x1]
    %37 = vrot.lane.b32.xlu0 %v36, 16
    %v38 = vpop.permute.xlu0 %37
    %vm39 = vcmask 195712
    %40 = vst.msk [vmem:[#allocation0] sm:$0x1] %vm39, %v38
    %s41 = scalar_lea.vmem %s0, 1
    %v42 = vld [vmem:[%s41] sm:$0x1]
    %43 = vrot.lane.b32.xlu0 %v42, 8
    %v44 = vpop.permute.xlu0 %43
    %vm45 = vcmask 130112
    %46 = vst.msk [vmem:[#allocation0] sm:$0x1] %vm45, %v44
    %s48 = sshllo.u32 0, 1
    %v50 = vld [vmem:[#allocation0] sm:%s48]
    %s51 = sshllo.u32 0, 1
    %52 = vst [vmem:[%s1] sm:%s51] %v50

// kernel: encoderblock_forward.1
$region0: #{encoderblock_forward.1}
  #allocation0 [shape = 'u32[]', space=smem, size = 0x4, offset = 0x4, fixed_abs, tag = 'smem constant byte address 0x4 - core index']
  #allocation1 [shape = 'u32[144,128]{1,0:T(1,128)}', space=vmem, size = 0x12000, scoped, tag = 'internal scratch']
  #allocation2 [shape = 'f32[2,10,80]{2,1,0:T(8,128)}', space=vmem, size = 0x4000, scoped, tag = 'scratch operand']
  #allocation3 [shape = 'f32[2,10,80]{2,1,0:T(8,128)}', space=vmem, size = 0x4000, scoped, tag = 'scratch operand']
  %s0 = inlined_call_operand.vmem [shape: f32[2,8,2,64], index: 0, kind: input, shape index: {}]
  %s1 = inlined_call_operand.vmem [shape: bf16[3,80,64], index: 1, kind: input, shape index: {}]
  %s2 = inlined_call_operand.vmem [shape: f32[1,8], index: 2, kind: input, shape index: {}]
  %s3 = inlined_call_operand.vmem [shape: f32[1,64], index: 3, kind: input, shape index: {}]
  %s4 = inlined_call_operand.vmem [shape: bf16[3,80,64], index: 4, kind: input, shape index: {}]
  %s5 = inlined_call_operand.vmem [shape: f32[1,8], index: 5, kind: input, shape index: {}]
  %s6 = inlined_call_operand.vmem [shape: f32[1,64], index: 6, kind: input, shape index: {}]
  %s7 = inlined_call_operand.vmem [shape: f32[64,8], index: 7, kind: input, shape index: {}]
  %s8 = inlined_call_operand.vmem [shape: f32[16,64], index: 8, kind: output, shape index: {}]
  %s9 = sld [smem:[#allocation0]]
  $region42: #{encoderblock_forward.1} parent=0
    _
  %s11 = ssub.s32 1, %s9
  %s12 = scalar_select 0, %s11, %s9
  // Predicated region
  $region2: #{encoderblock_forward.1} parent=0 // pred_check
    _
  $region3: #{encoderblock_forward.1} parent=0 // pred_check_branch
    %14 = sbr.rel (0) target = $region5
  $region4: #{encoderblock_forward.1} parent=0 // pred_region
    _
  $region5: #{encoderblock_forward.1} parent=0 // pred_fallthru
    _
  // Predicated region
  $region6: #{encoderblock_forward.1} parent=0 // pred_check
    _
  $region7: #{encoderblock_forward.1} parent=0 // pred_check_branch
    %16 = sbr.rel (0) target = $region9
  $region8: #{encoderblock_forward.1} parent=0 // pred_region
    _
  $region9: #{encoderblock_forward.1} parent=0 // pred_fallthru
    _
  // Predicated region
  $region10: #{encoderblock_forward.1} parent=0 // pred_check
    _
  $region11: #{encoderblock_forward.1} parent=0 // pred_check_branch
    %18 = sbr.rel (0) target = $region13
  $region12: #{encoderblock_forward.1} parent=0 // pred_region
    _
  $region13: #{encoderblock_forward.1} parent=0 // pred_fallthru
    _
  // Predicated region
  $region14: #{encoderblock_forward.1} parent=0 // pred_check
    _
  $region15: #{encoderblock_forward.1} parent=0 // pred_check_branch
    %20 = sbr.rel (0) target = $region17
  $region16: #{encoderblock_forward.1} parent=0 // pred_region
    _
  $region17: #{encoderblock_forward.1} parent=0 // pred_fallthru
    _
  // Predicated region
  $region18: #{encoderblock_forward.1} parent=0 // pred_check
    _
  $region19: #{encoderblock_forward.1} parent=0 // pred_check_branch
    %22 = sbr.rel (0) target = $region21
  $region20: #{encoderblock_forward.1} parent=0 // pred_region
    _
  $region21: #{encoderblock_forward.1} parent=0 // pred_fallthru
    _
  // Predicated region
  $region22: #{encoderblock_forward.1} parent=0 // pred_check
    _
  $region23: #{encoderblock_forward.1} parent=0 // pred_check_branch
    %24 = sbr.rel (0) target = $region25
  $region24: #{encoderblock_forward.1} parent=0 // pred_region
    _
  $region25: #{encoderblock_forward.1} parent=0 // pred_fallthru
    _
  // Predicated region
  $region26: #{encoderblock_forward.1} parent=0 // pred_check
    _
  $region27: #{encoderblock_forward.1} parent=0 // pred_check_branch
    %26 = sbr.rel (0) target = $region29
  $region28: #{encoderblock_forward.1} parent=0 // pred_region
    _
  $region29: #{encoderblock_forward.1} parent=0 // pred_fallthru
    _
  // Predicated region
  $region30: #{encoderblock_forward.1} parent=0 // pred_check
    _
  $region31: #{encoderblock_forward.1} parent=0 // pred_check_branch
    %28 = sbr.rel (0) target = $region33
  $region32: #{encoderblock_forward.1} parent=0 // pred_region
    _
  $region33: #{encoderblock_forward.1} parent=0 // pred_fallthru
    _
  %v30 = vld [vmem:[%s0] sm:$0x3]
  %v31 = vld [vmem:[%s0 + $0x2] sm:$0x3]
  %v32 = vld [vmem:[%s0 + $0x4] sm:$0x3]
  %v33 = vld [vmem:[%s0 + $0x6] sm:$0x3]
  %v34 = vld [vmem:[%s0 + $0x8] sm:$0x3]
  %v35 = vld [vmem:[%s0 + $0xa] sm:$0x3]
  %v36 = vld [vmem:[%s0 + $0xc] sm:$0x3]
  %v37 = vld [vmem:[%s0 + $0xe] sm:$0x3]
  %v38 = vld [vmem:[%s0 + $0x10] sm:$0x3]
  %v39 = vld [vmem:[%s0 + $0x12] sm:$0x3]
  %v40 = vld [vmem:[%s0 + $0x14] sm:$0x3]
  %v41 = vld [vmem:[%s0 + $0x16] sm:$0x3]
  %v42 = vld [vmem:[%s0 + $0x18] sm:$0x3]
  %v43 = vld [vmem:[%s0 + $0x1a] sm:$0x3]
  %v44 = vld [vmem:[%s0 + $0x1c] sm:$0x3]
  %v45 = vld [vmem:[%s0 + $0x1e] sm:$0x3]
  %v62 = vrot.slane %v30, 1
  %v63 = vrot.slane %v31, 1
  %v64 = vrot.slane %v32, 1
  %v65 = vrot.slane %v33, 1
  %v66 = vrot.slane %v34, 1
  %v67 = vrot.slane %v35, 1
  %v68 = vrot.slane %v36, 1
  %v69 = vrot.slane %v37, 1
  %v70 = vrot.slane %v38, 1
  %v71 = vrot.slane %v39, 1
  %v72 = vrot.slane %v40, 1
  %v73 = vrot.slane %v41, 1
  %v74 = vrot.slane %v42, 1
  %v75 = vrot.slane %v43, 1
  %v76 = vrot.slane %v44, 1
  %v77 = vrot.slane %v45, 1
  %v94 = vmax.f32 %v30, %v62
  %v95 = vmax.f32 %v31, %v63
  %v96 = vmax.f32 %v32, %v64
  %v97 = vmax.f32 %v33, %v65
  %v98 = vmax.f32 %v34, %v66
  %v99 = vmax.f32 %v35, %v67
  %v100 = vmax.f32 %v36, %v68
  %v101 = vmax.f32 %v37, %v69
  %v102 = vmax.f32 %v38, %v70
  %v103 = vmax.f32 %v39, %v71
  %v104 = vmax.f32 %v40, %v72
  %v105 = vmax.f32 %v41, %v73
  %v106 = vmax.f32 %v42, %v74
  %v107 = vmax.f32 %v43, %v75
  %v108 = vmax.f32 %v44, %v76
  %v109 = vmax.f32 %v45, %v77
  %126 = vrot.lane.b32.xlu0 %v94, 124
  %v127 = vpop.permute.xlu0 %126
  %128 = vrot.lane.b32.xlu0 %v95, 124
  %v129 = vpop.permute.xlu0 %128
  %130 = vrot.lane.b32.xlu0 %v96, 124
  %v131 = vpop.permute.xlu0 %130
  %132 = vrot.lane.b32.xlu0 %v97, 124
  %v133 = vpop.permute.xlu0 %132
  %134 = vrot.lane.b32.xlu0 %v98, 124
  %v135 = vpop.permute.xlu0 %134
  %136 = vrot.lane.b32.xlu0 %v99, 124
  %v137 = vpop.permute.xlu0 %136
  %138 = vrot.lane.b32.xlu0 %v100, 124
  %v139 = vpop.permute.xlu0 %138
  %140 = vrot.lane.b32.xlu0 %v101, 124
  %v141 = vpop.permute.xlu0 %140
  %142 = vrot.lane.b32.xlu0 %v102, 124
  %v143 = vpop.permute.xlu0 %142
  %144 = vrot.lane.b32.xlu0 %v103, 124
  %v145 = vpop.permute.xlu0 %144
  %146 = vrot.lane.b32.xlu0 %v104, 124
  %v147 = vpop.permute.xlu0 %146
  %148 = vrot.lane.b32.xlu0 %v105, 124
  %v149 = vpop.permute.xlu0 %148
  %150 = vrot.lane.b32.xlu0 %v106, 124
  %v151 = vpop.permute.xlu0 %150
  %152 = vrot.lane.b32.xlu0 %v107, 124
  %v153 = vpop.permute.xlu0 %152
  %154 = vrot.lane.b32.xlu0 %v108, 124
  %v155 = vpop.permute.xlu0 %154
  %156 = vrot.lane.b32.xlu0 %v109, 124
  %v157 = vpop.permute.xlu0 %156
  %v174 = vmax.f32 %v94, %v127
  %v175 = vmax.f32 %v95, %v129
  %v176 = vmax.f32 %v96, %v131
  %v177 = vmax.f32 %v97, %v133
  %v178 = vmax.f32 %v98, %v135
  %v179 = vmax.f32 %v99, %v137
  %v180 = vmax.f32 %v100, %v139
  %v181 = vmax.f32 %v101, %v141
  %v182 = vmax.f32 %v102, %v143
  %v183 = vmax.f32 %v103, %v145
  %v184 = vmax.f32 %v104, %v147
  %v185 = vmax.f32 %v105, %v149
  %v186 = vmax.f32 %v106, %v151
  %v187 = vmax.f32 %v107, %v153
  %v188 = vmax.f32 %v108, %v155
  %v189 = vmax.f32 %v109, %v157
  %vm190 = vcmask 647168
  %191 = vst.msk [vmem:[#allocation2] sm:$0x1] %vm190, 0.0
  %192 = vst.msk [vmem:[#allocation2 + $0x10] sm:$0x1] %vm190, 0.0
  %193 = vst.msk [vmem:[#allocation2 + $0x9] sm:$0x1] %vm190, 0.0
  %194 = vst.msk [vmem:[#allocation2 + $0x19] sm:$0x1] %vm190, 0.0
  %vm195 = vcmask 64512
  %196 = vst.msk [vmem:[#allocation2 + $0x1] sm:$0xff] %vm195, 0.0
  %197 = vst.msk [vmem:[#allocation2 + $0x11] sm:$0xff] %vm195, 0.0
  %vm198 = vcmask 654880
  %199 = vst.msk [vmem:[#allocation2 + $0x1] sm:$0xff] %vm198, 0.0
  %200 = vst.msk [vmem:[#allocation2 + $0x11] sm:$0xff] %vm198, 0.0
  %v217 = vrot.slane %v175, 7
  %vm218 = vcmask 1041409
  %v219 = vsel %vm218, %v217, %v174
  %v220 = vrot.slane %v176, 6
  %vm221 = vcmask 1042434
  %v222 = vsel %vm221, %v220, %v219
  %v223 = vrot.slane %v177, 5
  %vm224 = vcmask 1043459
  %v225 = vsel %vm224, %v223, %v222
  %v226 = vrot.slane %v178, 4
  %vm227 = vcmask 1044484
  %v228 = vsel %vm227, %v226, %v225
  %v229 = vrot.slane %v179, 3
  %vm230 = vcmask 1045509
  %v231 = vsel %vm230, %v229, %v228
  %v232 = vrot.slane %v180, 2
  %vm233 = vcmask 1046534
  %v234 = vsel %vm233, %v232, %v231
  %v235 = vrot.slane %v181, 1
  %vm236 = vcmask 1047559
  %v237 = vsel %vm236, %v235, %v234
  %v238 = vrot.slane %v183, 7
  %v239 = vsel %vm218, %v238, %v182
  %v240 = vrot.slane %v184, 6
  %v241 = vsel %vm221, %v240, %v239
  %v242 = vrot.slane %v185, 5
  %v243 = vsel %vm224, %v242, %v241
  %v244 = vrot.slane %v186, 4
  %v245 = vsel %vm227, %v244, %v243
  %v246 = vrot.slane %v187, 3
  %v247 = vsel %vm230, %v246, %v245
  %v248 = vrot.slane %v188, 2
  %v249 = vsel %vm233, %v248, %v247
  %v250 = vrot.slane %v189, 1
  %v251 = vsel %vm236, %v250, %v249
  %252 = vrot.lane.b32.xlu0 %v237, 8
  %v253 = vpop.permute.xlu0 %252
  %254 = vrot.lane.b32.xlu0 %v251, 8
  %v255 = vpop.permute.xlu0 %254
  %vm258 = vcmask 556096
  %259 = vst.msk [vmem:[#allocation2 + $0x1] sm:$0xff] %vm258, %v253
  %260 = vst.msk [vmem:[#allocation2 + $0x11] sm:$0xff] %vm258, %v255
  %v261 = vld [vmem:[#allocation2] sm:$0xff]
  %v262 = vld [vmem:[#allocation2 + $0x10] sm:$0xff]
  %v263 = vpack.c.bf16 %v262, %v261
  %v264 = vld [vmem:[%s1] sm:$0xf]
  %v265 = vld [vmem:[%s1 + $0x4] sm:$0xf]
  %v266 = vld [vmem:[%s1 + $0x8] sm:$0xf]
  %v267 = vld [vmem:[%s1 + $0xc] sm:$0xf]
  %v268 = vld [vmem:[%s1 + $0x10] sm:$0xf]
  %v269 = vld [vmem:[%s1 + $0x14] sm:$0xf]
  %v270 = vld [vmem:[%s1 + $0x18] sm:$0xf]
  %v271 = vld [vmem:[%s1 + $0x1c] sm:$0xf]
  %v272 = vld [vmem:[%s1 + $0x20] sm:$0xf]
  %v273 = vld [vmem:[%s1 + $0x24] sm:$0xf]
  %v274 = vld [vmem:[#allocation2 + $0x1] sm:$0xff]
  %v275 = vld [vmem:[#allocation2 + $0x11] sm:$0xff]
  %v276 = vpack.c.bf16 %v275, %v274
  %s277 = scalar_lea.vmem %s1, 40
  %v278 = vld [vmem:[%s277] sm:$0xf]
  %v279 = vld [vmem:[%s277 + $0x4] sm:$0xf]
  %v280 = vld [vmem:[%s277 + $0x8] sm:$0xf]
  %v281 = vld [vmem:[%s277 + $0xc] sm:$0xf]
  %v282 = vld [vmem:[%s277 + $0x10] sm:$0xf]
  %v283 = vld [vmem:[%s277 + $0x14] sm:$0xf]
  %v284 = vld [vmem:[%s277 + $0x18] sm:$0xf]
  %v285 = vld [vmem:[%s277 + $0x1c] sm:$0xf]
  %v286 = vld [vmem:[%s277 + $0x20] sm:$0xf]
  %v287 = vld [vmem:[%s277 + $0x24] sm:$0xf]
  %v298 = vunpack.c.l.b16 %v278
  %v299 = vunpack.c.l.b16 %v279
  %v300 = vunpack.c.l.b16 %v280
  %v301 = vunpack.c.l.b16 %v281
  %v302 = vunpack.c.l.b16 %v282
  %v303 = vunpack.c.l.b16 %v283
  %v304 = vunpack.c.l.b16 %v284
  %v305 = vunpack.c.l.b16 %v285
  %v306 = vunpack.c.l.b16 %v286
  %v307 = vunpack.c.l.b16 %v287
  %v308 = vpack.c.b16 %v299, %v298
  %v309 = vpack.c.b16 %v301, %v300
  %v310 = vpack.c.b16 %v303, %v302
  %v311 = vpack.c.b16 %v305, %v304
  %v312 = vpack.c.b16 %v307, %v306
  %vm318 = vcmask 654336
  %v320 = vsel %vm318, %v276, 0
  %322 = vmatprep.subr.bf16.mxu0 0
  %323 = vmatpush1.bf16.msra.mxu0 %v308
  %324 = vmatprep.subr.bf16.mxu0 0
  %325 = vmatpush1.bf16.msra.mxu0 %v309
  %326 = vmatprep.subr.bf16.mxu0 0
  %327 = vmatpush1.bf16.msra.mxu0 %v310
  %328 = vmatprep.subr.bf16.mxu0 0
  %329 = vmatpush1.bf16.msra.mxu0 %v311
  %330 = vmatprep.subr.bf16.mxu0 0
  %331 = vmatpush1.bf16.msra.mxu0 %v312
  %332 = vmatprep.subr.bf16.mxu0 0
  %333 = vmatpush1.bf16.msra.mxu0 0
  %334 = vmatprep.subr.bf16.mxu0 0
  %335 = vmatpush1.bf16.msra.mxu0 0
  %336 = vmatprep.subr.bf16.mxu0 0
  %337 = vmatpush1.bf16.msra.mxu0 0
  %338 = vmatprep.subr.bf16.mxu0 0
  %339 = vmatpush1.bf16.msra.mxu0 0
  %340 = vmatprep.subr.bf16.mxu0 0
  %341 = vmatpush1.bf16.msra.mxu0 0
  %342 = vmatprep.subr.bf16.mxu0 0
  %343 = vmatpush1.bf16.msra.mxu0 0
  %344 = vmatprep.subr.bf16.mxu0 0
  %345 = vmatpush1.bf16.msra.mxu0 0
  %346 = vmatprep.subr.bf16.mxu0 0
  %347 = vmatpush1.bf16.msra.mxu0 0
  %348 = vmatprep.subr.bf16.mxu0 0
  %349 = vmatpush1.bf16.msra.mxu0 0
  %350 = vmatprep.subr.bf16.mxu0 0
  %351 = vmatpush1.bf16.msra.mxu0 0
  %352 = vmatprep.subr.bf16.mxu0 0
  %353 = vmatpush1.bf16.msra.mxu0 0
  %354 = vmatprep.mubr.bf16.mxu0 0
  %355 = vmatmul.mubr.bf16.gmra.mrb[0].mxu0 %v320
  %v356 = vpop.f32.mrb[0].mxu0
  %v357 = vadd.f32 0.0, %v356
  %v358 = vpop.f32.mrb[0].mxu0
  %v359 = vpop.f32.mrb[0].mxu0
  %v360 = vadd.f32 0.0, %v359
  %v361 = vpop.f32.mrb[0].mxu0
  %362 = vdwg.mxu0
  %v373 = vunpack.c.l.b16 %v264
  %v374 = vunpack.c.l.b16 %v265
  %v375 = vunpack.c.l.b16 %v266
  %v376 = vunpack.c.l.b16 %v267
  %v377 = vunpack.c.l.b16 %v268
  %v378 = vunpack.c.l.b16 %v269
  %v379 = vunpack.c.l.b16 %v270
  %v380 = vunpack.c.l.b16 %v271
  %v381 = vunpack.c.l.b16 %v272
  %v382 = vunpack.c.l.b16 %v273
  %v383 = vpack.c.b16 %v374, %v373
  %v384 = vpack.c.b16 %v376, %v375
  %v385 = vpack.c.b16 %v378, %v377
  %v386 = vpack.c.b16 %v380, %v379
  %v387 = vpack.c.b16 %v382, %v381
  %v394 = vsel %vm318, %v263, 0
  %396 = vmatprep.subr.bf16.mxu0 0
  %397 = vmatpush1.bf16.msra.mxu0 %v383
  %398 = vmatprep.subr.bf16.mxu0 0
  %399 = vmatpush1.bf16.msra.mxu0 %v384
  %400 = vmatprep.subr.bf16.mxu0 0
  %401 = vmatpush1.bf16.msra.mxu0 %v385
  %402 = vmatprep.subr.bf16.mxu0 0
  %403 = vmatpush1.bf16.msra.mxu0 %v386
  %404 = vmatprep.subr.bf16.mxu0 0
  %405 = vmatpush1.bf16.msra.mxu0 %v387
  %406 = vmatprep.subr.bf16.mxu0 0
  %407 = vmatpush1.bf16.msra.mxu0 0
  %408 = vmatprep.subr.bf16.mxu0 0
  %409 = vmatpush1.bf16.msra.mxu0 0
  %410 = vmatprep.subr.bf16.mxu0 0
  %411 = vmatpush1.bf16.msra.mxu0 0
  %412 = vmatprep.subr.bf16.mxu0 0
  %413 = vmatpush1.bf16.msra.mxu0 0
  %414 = vmatprep.subr.bf16.mxu0 0
  %415 = vmatpush1.bf16.msra.mxu0 0
  %416 = vmatprep.subr.bf16.mxu0 0
  %417 = vmatpush1.bf16.msra.mxu0 0
  %418 = vmatprep.subr.bf16.mxu0 0
  %419 = vmatpush1.bf16.msra.mxu0 0
  %420 = vmatprep.subr.bf16.mxu0 0
  %421 = vmatpush1.bf16.msra.mxu0 0
  %422 = vmatprep.subr.bf16.mxu0 0
  %423 = vmatpush1.bf16.msra.mxu0 0
  %424 = vmatprep.subr.bf16.mxu0 0
  %425 = vmatpush1.bf16.msra.mxu0 0
  %426 = vmatprep.subr.bf16.mxu0 0
  %427 = vmatpush1.bf16.msra.mxu0 0
  %428 = vmatprep.mubr.bf16.mxu0 0
  %429 = vmatmul.mubr.bf16.gmra.mrb[0].mxu0 %v394
  %v430 = vpop.f32.mrb[0].mxu0
  %v431 = vadd.f32 %v357, %v430
  %v432 = vpop.f32.mrb[0].mxu0
  %v433 = vpop.f32.mrb[0].mxu0
  %v434 = vadd.f32 %v360, %v433
  %v435 = vpop.f32.mrb[0].mxu0
  %436 = vdwg.mxu0
  %v437 = vld [vmem:[#allocation2 + $0x2] sm:$0xff]
  %v438 = vld [vmem:[#allocation2 + $0x12] sm:$0xff]
  %v439 = vpack.c.bf16 %v438, %v437
  %s440 = scalar_lea.vmem %s1, 80
  %v441 = vld [vmem:[%s440] sm:$0xf]
  %v442 = vld [vmem:[%s440 + $0x4] sm:$0xf]
  %v443 = vld [vmem:[%s440 + $0x8] sm:$0xf]
  %v444 = vld [vmem:[%s440 + $0xc] sm:$0xf]
  %v445 = vld [vmem:[%s440 + $0x10] sm:$0xf]
  %v446 = vld [vmem:[%s440 + $0x14] sm:$0xf]
  %v447 = vld [vmem:[%s440 + $0x18] sm:$0xf]
  %v448 = vld [vmem:[%s440 + $0x1c] sm:$0xf]
  %v449 = vld [vmem:[%s440 + $0x20] sm:$0xf]
  %v450 = vld [vmem:[%s440 + $0x24] sm:$0xf]
  %v461 = vunpack.c.l.b16 %v441
  %v462 = vunpack.c.l.b16 %v442
  %v463 = vunpack.c.l.b16 %v443
  %v464 = vunpack.c.l.b16 %v444
  %v465 = vunpack.c.l.b16 %v445
  %v466 = vunpack.c.l.b16 %v446
  %v467 = vunpack.c.l.b16 %v447
  %v468 = vunpack.c.l.b16 %v448
  %v469 = vunpack.c.l.b16 %v449
  %v470 = vunpack.c.l.b16 %v450
  %v471 = vpack.c.b16 %v462, %v461
  %v472 = vpack.c.b16 %v464, %v463
  %v473 = vpack.c.b16 %v466, %v465
  %v474 = vpack.c.b16 %v468, %v467
  %v475 = vpack.c.b16 %v470, %v469
  %v482 = vsel %vm318, %v439, 0
  %484 = vmatprep.subr.bf16.mxu0 0
  %485 = vmatpush1.bf16.msra.mxu0 %v471
  %486 = vmatprep.subr.bf16.mxu0 0
  %487 = vmatpush1.bf16.msra.mxu0 %v472
  %488 = vmatprep.subr.bf16.mxu0 0
  %489 = vmatpush1.bf16.msra.mxu0 %v473
  %490 = vmatprep.subr.bf16.mxu0 0
  %491 = vmatpush1.bf16.msra.mxu0 %v474
  %492 = vmatprep.subr.bf16.mxu0 0
  %493 = vmatpush1.bf16.msra.mxu0 %v475
  %494 = vmatprep.subr.bf16.mxu0 0
  %495 = vmatpush1.bf16.msra.mxu0 0
  %496 = vmatprep.subr.bf16.mxu0 0
  %497 = vmatpush1.bf16.msra.mxu0 0
  %498 = vmatprep.subr.bf16.mxu0 0
  %499 = vmatpush1.bf16.msra.mxu0 0
  %500 = vmatprep.subr.bf16.mxu0 0
  %501 = vmatpush1.bf16.msra.mxu0 0
  %502 = vmatprep.subr.bf16.mxu0 0
  %503 = vmatpush1.bf16.msra.mxu0 0
  %504 = vmatprep.subr.bf16.mxu0 0
  %505 = vmatpush1.bf16.msra.mxu0 0
  %506 = vmatprep.subr.bf16.mxu0 0
  %507 = vmatpush1.bf16.msra.mxu0 0
  %508 = vmatprep.subr.bf16.mxu0 0
  %509 = vmatpush1.bf16.msra.mxu0 0
  %510 = vmatprep.subr.bf16.mxu0 0
  %511 = vmatpush1.bf16.msra.mxu0 0
  %512 = vmatprep.subr.bf16.mxu0 0
  %513 = vmatpush1.bf16.msra.mxu0 0
  %514 = vmatprep.subr.bf16.mxu0 0
  %515 = vmatpush1.bf16.msra.mxu0 0
  %516 = vmatprep.mubr.bf16.mxu0 0
  %517 = vmatmul.mubr.bf16.gmra.mrb[0].mxu0 %v482
  %v518 = vpop.f32.mrb[0].mxu0
  %v519 = vadd.f32 0.0, %v518
  %v520 = vpop.f32.mrb[0].mxu0
  %v521 = vpop.f32.mrb[0].mxu0
  %v522 = vadd.f32 0.0, %v521
  %v523 = vpop.f32.mrb[0].mxu0
  %524 = vdwg.mxu0
  %v525 = vadd.f32 %v431, %v519
  %v526 = vadd.f32 %v434, %v522
  %v527 = vld [vmem:[%s7] sm:$0xff]
  %v528 = vld [vmem:[%s7 + $0x8] sm:$0xff]
  %v529 = vld [vmem:[%s7 + $0x10] sm:$0xff]
  %v530 = vld [vmem:[%s7 + $0x18] sm:$0xff]
  %v531 = vld [vmem:[%s7 + $0x20] sm:$0xff]
  %v532 = vld [vmem:[%s7 + $0x28] sm:$0xff]
  %v533 = vld [vmem:[%s7 + $0x30] sm:$0xff]
  %v534 = vld [vmem:[%s7 + $0x38] sm:$0xff]
  %vm535 = vcmask 523264
  %v537 = vsel %vm535, %v525, 0
  %v540 = vsel %vm535, %v526, 0
  %542 = vmatprep.subr.mxu0 0.0
  %543 = vmatpush1.msra.mxu0 %v527
  %544 = vmatprep.subr.mxu0 0.0
  %545 = vmatpush1.msra.mxu0 %v528
  %546 = vmatprep.subr.mxu0 0.0
  %547 = vmatpush1.msra.mxu0 %v529
  %548 = vmatprep.subr.mxu0 0.0
  %549 = vmatpush1.msra.mxu0 %v530
  %550 = vmatprep.subr.mxu0 0.0
  %551 = vmatpush1.msra.mxu0 %v531
  %552 = vmatprep.subr.mxu0 0.0
  %553 = vmatpush1.msra.mxu0 %v532
  %554 = vmatprep.subr.mxu0 0.0
  %555 = vmatpush1.msra.mxu0 %v533
  %556 = vmatprep.subr.mxu0 0.0
  %557 = vmatpush1.msra.mxu0 %v534
  %558 = vmatprep.subr.mxu0 0.0
  %559 = vmatpush1.msra.mxu0 0.0
  %560 = vmatprep.subr.mxu0 0.0
  %561 = vmatpush1.msra.mxu0 0.0
  %562 = vmatprep.subr.mxu0 0.0
  %563 = vmatpush1.msra.mxu0 0.0
  %564 = vmatprep.subr.mxu0 0.0
  %565 = vmatpush1.msra.mxu0 0.0
  %566 = vmatprep.subr.mxu0 0.0
  %567 = vmatpush1.msra.mxu0 0.0
  %568 = vmatprep.subr.mxu0 0.0
  %569 = vmatpush1.msra.mxu0 0.0
  %570 = vmatprep.subr.mxu0 0.0
  %571 = vmatpush1.msra.mxu0 0.0
  %572 = vmatprep.subr.mxu0 0.0
  %573 = vmatpush1.msra.mxu0 0.0
  %574 = vmatprep.subr.mxu0 0.0
  %575 = vmatpush1.msra.mxu0 0.0
  %576 = vmatprep.subr.mxu0 0.0
  %577 = vmatpush1.msra.mxu0 0.0
  %578 = vmatprep.subr.mxu0 0.0
  %579 = vmatpush1.msra.mxu0 0.0
  %580 = vmatprep.subr.mxu0 0.0
  %581 = vmatpush1.msra.mxu0 0.0
  %582 = vmatprep.subr.mxu0 0.0
  %583 = vmatpush1.msra.mxu0 0.0
  %584 = vmatprep.subr.mxu0 0.0
  %585 = vmatpush1.msra.mxu0 0.0
  %586 = vmatprep.subr.mxu0 0.0
  %587 = vmatpush1.msra.mxu0 0.0
  %588 = vmatprep.subr.mxu0 0.0
  %589 = vmatpush1.msra.mxu0 0.0
  %590 = vmatprep.subr.mxu0 0.0
  %591 = vmatpush1.msra.mxu0 0.0
  %592 = vmatprep.subr.mxu0 0.0
  %593 = vmatpush1.msra.mxu0 0.0
  %594 = vmatprep.subr.mxu0 0.0
  %595 = vmatpush1.msra.mxu0 0.0
  %596 = vmatprep.subr.mxu0 0.0
  %597 = vmatpush1.msra.mxu0 0.0
  %598 = vmatprep.subr.mxu0 0.0
  %599 = vmatpush1.msra.mxu0 0.0
  %600 = vmatprep.subr.mxu0 0.0
  %601 = vmatpush1.msra.mxu0 0.0
  %602 = vmatprep.subr.mxu0 0.0
  %603 = vmatpush1.msra.mxu0 0.0
  %604 = vmatprep.subr.mxu0 0.0
  %605 = vmatpush1.msra.mxu0 0.0
  %606 = vmatprep.mubr.f32.mxu0 0.0
  %607 = vmatmul.mubr.f32.gmra.mrb[0].mxu0 %v537
  %v608 = vpop.f32.mrb[0].mxu0
  %v609 = vadd.f32 0.0, %v608
  %v610 = vpop.f32.mrb[0].mxu0
  %611 = vmatprep.mubr.f32.mxu0 0.0
  %612 = vmatmul.mubr.f32.gmra.mrb[0].mxu0 %v540
  %v613 = vpop.f32.mrb[0].mxu0
  %v614 = vadd.f32 0.0, %v613
  %v615 = vpop.f32.mrb[0].mxu0
  %616 = vdwg.mxu0
  %v617 = vsel %vm195, %v609, 0.0
  %v618 = vsel %vm195, %v614, 0.0
  %v619 = vadd.f32 %v617, %v618
  %v620 = vrot.slane %v619, 4
  %v621 = vadd.f32 %v619, %v620
  %v622 = vrot.slane %v621, 2
  %v623 = vadd.f32 %v621, %v622
  %v624 = vrot.slane %v623, 1
  %v625 = vadd.f32 %v623, %v624
  %v626 = vmul.f32 %v625, 0.0078125
  %628 = vrot.lane.b32.xlu0 %v626, 8
  %v629 = vpop.permute.xlu0 %628
  %631 = vrot.lane.b32.xlu0 %v626, 16
  %v632 = vpop.permute.xlu0 %631
  %634 = vrot.lane.b32.xlu0 %v626, 24
  %v635 = vpop.permute.xlu0 %634
  %637 = vrot.lane.b32.xlu0 %v626, 32
  %v638 = vpop.permute.xlu0 %637
  %640 = vrot.lane.b32.xlu0 %v626, 40
  %v641 = vpop.permute.xlu0 %640
  %643 = vrot.lane.b32.xlu0 %v626, 48
  %v644 = vpop.permute.xlu0 %643
  %646 = vrot.lane.b32.xlu0 %v626, 56
  %v647 = vpop.permute.xlu0 %646
  %v649 = vsel %vm195, %v626, %v629
  %vm650 = vcmask 130048
  %v651 = vsel %vm650, %v649, %v632
  %vm652 = vcmask 195584
  %v653 = vsel %vm652, %v651, %v635
  %vm654 = vcmask 261120
  %v655 = vsel %vm654, %v653, %v638
  %vm656 = vcmask 326656
  %v657 = vsel %vm656, %v655, %v641
  %vm658 = vcmask 392192
  %v659 = vsel %vm658, %v657, %v644
  %vm660 = vcmask 457728
  %v661 = vsel %vm660, %v659, %v647
  %v662 = vlaneseq
  %v663 = vshrl.u32 %v662, 7
  %v664 = vsub.s32 0, %v663
  %v665 = vrot.slane %v661, %v664
  %v666 = vsub.f32 %v525, %v665
  %v667 = vsub.f32 %v526, %v665
  %v668 = vmul.f32 %v666, %v666
  %v669 = vmul.f32 %v667, %v667
  %v671 = vsel %vm535, %v668, 0
  %v674 = vsel %vm535, %v669, 0
  %676 = vmatprep.subr.mxu0 0.0
  %677 = vmatpush1.msra.mxu0 %v527
  %678 = vmatprep.subr.mxu0 0.0
  %679 = vmatpush1.msra.mxu0 %v528
  %680 = vmatprep.subr.mxu0 0.0
  %681 = vmatpush1.msra.mxu0 %v529
  %682 = vmatprep.subr.mxu0 0.0
  %683 = vmatpush1.msra.mxu0 %v530
  %684 = vmatprep.subr.mxu0 0.0
  %685 = vmatpush1.msra.mxu0 %v531
  %686 = vmatprep.subr.mxu0 0.0
  %687 = vmatpush1.msra.mxu0 %v532
  %688 = vmatprep.subr.mxu0 0.0
  %689 = vmatpush1.msra.mxu0 %v533
  %690 = vmatprep.subr.mxu0 0.0
  %691 = vmatpush1.msra.mxu0 %v534
  %692 = vmatprep.subr.mxu0 0.0
  %693 = vmatpush1.msra.mxu0 0.0
  %694 = vmatprep.subr.mxu0 0.0
  %695 = vmatpush1.msra.mxu0 0.0
  %696 = vmatprep.subr.mxu0 0.0
  %697 = vmatpush1.msra.mxu0 0.0
  %698 = vmatprep.subr.mxu0 0.0
  %699 = vmatpush1.msra.mxu0 0.0
  %700 = vmatprep.subr.mxu0 0.0
  %701 = vmatpush1.msra.mxu0 0.0
  %702 = vmatprep.subr.mxu0 0.0
  %703 = vmatpush1.msra.mxu0 0.0
  %704 = vmatprep.subr.mxu0 0.0
  %705 = vmatpush1.msra.mxu0 0.0
  %706 = vmatprep.subr.mxu0 0.0
  %707 = vmatpush1.msra.mxu0 0.0
  %708 = vmatprep.subr.mxu0 0.0
  %709 = vmatpush1.msra.mxu0 0.0
  %710 = vmatprep.subr.mxu0 0.0
  %711 = vmatpush1.msra.mxu0 0.0
  %712 = vmatprep.subr.mxu0 0.0
  %713 = vmatpush1.msra.mxu0 0.0
  %714 = vmatprep.subr.mxu0 0.0
  %715 = vmatpush1.msra.mxu0 0.0
  %716 = vmatprep.subr.mxu0 0.0
  %717 = vmatpush1.msra.mxu0 0.0
  %718 = vmatprep.subr.mxu0 0.0
  %719 = vmatpush1.msra.mxu0 0.0
  %720 = vmatprep.subr.mxu0 0.0
  %721 = vmatpush1.msra.mxu0 0.0
  %722 = vmatprep.subr.mxu0 0.0
  %723 = vmatpush1.msra.mxu0 0.0
  %724 = vmatprep.subr.mxu0 0.0
  %725 = vmatpush1.msra.mxu0 0.0
  %726 = vmatprep.subr.mxu0 0.0
  %727 = vmatpush1.msra.mxu0 0.0
  %728 = vmatprep.subr.mxu0 0.0
  %729 = vmatpush1.msra.mxu0 0.0
  %730 = vmatprep.subr.mxu0 0.0
  %731 = vmatpush1.msra.mxu0 0.0
  %732 = vmatprep.subr.mxu0 0.0
  %733 = vmatpush1.msra.mxu0 0.0
  %734 = vmatprep.subr.mxu0 0.0
  %735 = vmatpush1.msra.mxu0 0.0
  %736 = vmatprep.subr.mxu0 0.0
  %737 = vmatpush1.msra.mxu0 0.0
  %738 = vmatprep.subr.mxu0 0.0
  %739 = vmatpush1.msra.mxu0 0.0
  %740 = vmatprep.mubr.f32.mxu0 0.0
  %741 = vmatmul.mubr.f32.gmra.mrb[0].mxu0 %v671
  %v742 = vpop.f32.mrb[0].mxu0
  %v743 = vadd.f32 0.0, %v742
  %v744 = vpop.f32.mrb[0].mxu0
  %745 = vmatprep.mubr.f32.mxu0 0.0
  %746 = vmatmul.mubr.f32.gmra.mrb[0].mxu0 %v674
  %v747 = vpop.f32.mrb[0].mxu0
  %v748 = vadd.f32 0.0, %v747
  %v749 = vpop.f32.mrb[0].mxu0
  %750 = vdwg.mxu0
  %v751 = vsel %vm195, %v743, 0.0
  %v752 = vsel %vm195, %v748, 0.0
  %v753 = vadd.f32 %v751, %v752
  %v754 = vrot.slane %v753, 4
  %v755 = vadd.f32 %v753, %v754
  %v756 = vrot.slane %v755, 2
  %v757 = vadd.f32 %v755, %v756
  %v758 = vrot.slane %v757, 1
  %v759 = vadd.f32 %v757, %v758
  %v760 = vmul.f32 %v759, 0.0078125
  %v761 = vld [vmem:[%s2] sm:$0x1]
  %v762 = vadd.f32 %v760, 1e-05
  %v763 = vrsqrt.pop %v762
  %v764 = vmul.f32 %v761, %v763
  %v766 = vlaneseq
  %v767 = vshrl.u32 %v766, 7
  %v768 = vsub.s32 0, %v767
  %v769 = vrot.slane %v764, %v768
  %770 = vrot.lane.b32.xlu0 %v769, 8
  %v771 = vpop.permute.xlu0 %770
  %773 = vrot.lane.b32.xlu0 %v769, 16
  %v774 = vpop.permute.xlu0 %773
  %776 = vrot.lane.b32.xlu0 %v769, 24
  %v777 = vpop.permute.xlu0 %776
  %779 = vrot.lane.b32.xlu0 %v769, 32
  %v780 = vpop.permute.xlu0 %779
  %782 = vrot.lane.b32.xlu0 %v769, 40
  %v783 = vpop.permute.xlu0 %782
  %785 = vrot.lane.b32.xlu0 %v769, 48
  %v786 = vpop.permute.xlu0 %785
  %788 = vrot.lane.b32.xlu0 %v769, 56
  %v789 = vpop.permute.xlu0 %788
  %v791 = vsel %vm195, %v764, %v771
  %v792 = vsel %vm650, %v791, %v774
  %v793 = vsel %vm652, %v792, %v777
  %v794 = vsel %vm654, %v793, %v780
  %v795 = vsel %vm656, %v794, %v783
  %v796 = vsel %vm658, %v795, %v786
  %v797 = vsel %vm660, %v796, %v789
  %v798 = vlaneseq
  %v799 = vshrl.u32 %v798, 7
  %v800 = vsub.s32 0, %v799
  %v801 = vrot.slane %v797, %v800
  %v802 = vmul.f32 %v666, %v801
  %v803 = vmul.f32 %v667, %v801
  %v804 = vld [vmem:[%s3] sm:$0x1]
  %v806 = vlaneseq
  %v807 = vshrl.u32 %v806, 7
  %v808 = vsub.s32 0, %v807
  %v809 = vrot.slane %v804, %v808
  %v811 = vadd.f32 %v802, %v809
  %v812 = vadd.f32 %v803, %v809
  %v813 = vmax.f32 %v811, 0.0
  %v814 = vmax.f32 %v812, 0.0
  %815 = vst.msk [vmem:[#allocation3] sm:$0x1] %vm190, 0.0
  %816 = vst.msk [vmem:[#allocation3 + $0x10] sm:$0x1] %vm190, 0.0
  %817 = vst.msk [vmem:[#allocation3 + $0x9] sm:$0x1] %vm190, 0.0
  %818 = vst.msk [vmem:[#allocation3 + $0x19] sm:$0x1] %vm190, 0.0
  %819 = vst.msk [vmem:[#allocation3 + $0x1] sm:$0xff] %vm195, 0.0
  %820 = vst.msk [vmem:[#allocation3 + $0x11] sm:$0xff] %vm195, 0.0
  %vm821 = vcmask 654912
  %822 = vst.msk [vmem:[#allocation3 + $0x1] sm:$0xff] %vm821, 0.0
  %823 = vst.msk [vmem:[#allocation3 + $0x11] sm:$0xff] %vm821, 0.0
  %826 = vrot.lane.b32.xlu0 %v813, 8
  %v827 = vpop.permute.xlu0 %826
  %828 = vrot.lane.b32.xlu0 %v814, 8
  %v829 = vpop.permute.xlu0 %828
  %vm832 = vcmask 588864
  %833 = vst.msk [vmem:[#allocation3 + $0x1] sm:$0xff] %vm832, %v827
  %834 = vst.msk [vmem:[#allocation3 + $0x11] sm:$0xff] %vm832, %v829
  %v835 = vld [vmem:[#allocation3] sm:$0xff]
  %v836 = vld [vmem:[#allocation3 + $0x10] sm:$0xff]
  %v837 = vpack.c.bf16 %v836, %v835
  %v838 = vld [vmem:[%s4] sm:$0xf]
  %v839 = vld [vmem:[%s4 + $0x4] sm:$0xf]
  %v840 = vld [vmem:[%s4 + $0x8] sm:$0xf]
  %v841 = vld [vmem:[%s4 + $0xc] sm:$0xf]
  %v842 = vld [vmem:[%s4 + $0x10] sm:$0xf]
  %v843 = vld [vmem:[%s4 + $0x14] sm:$0xf]
  %v844 = vld [vmem:[%s4 + $0x18] sm:$0xf]
  %v845 = vld [vmem:[%s4 + $0x1c] sm:$0xf]
  %v846 = vld [vmem:[%s4 + $0x20] sm:$0xf]
  %v847 = vld [vmem:[%s4 + $0x24] sm:$0xf]
  %v848 = vld [vmem:[#allocation3 + $0x1] sm:$0xff]
  %v849 = vld [vmem:[#allocation3 + $0x11] sm:$0xff]
  %v850 = vpack.c.bf16 %v849, %v848
  %s851 = scalar_lea.vmem %s4, 40
  %v852 = vld [vmem:[%s851] sm:$0xf]
  %v853 = vld [vmem:[%s851 + $0x4] sm:$0xf]
  %v854 = vld [vmem:[%s851 + $0x8] sm:$0xf]
  %v855 = vld [vmem:[%s851 + $0xc] sm:$0xf]
  %v856 = vld [vmem:[%s851 + $0x10] sm:$0xf]
  %v857 = vld [vmem:[%s851 + $0x14] sm:$0xf]
  %v858 = vld [vmem:[%s851 + $0x18] sm:$0xf]
  %v859 = vld [vmem:[%s851 + $0x1c] sm:$0xf]
  %v860 = vld [vmem:[%s851 + $0x20] sm:$0xf]
  %v861 = vld [vmem:[%s851 + $0x24] sm:$0xf]
  %v872 = vunpack.c.l.b16 %v852
  %v873 = vunpack.c.l.b16 %v853
  %v874 = vunpack.c.l.b16 %v854
  %v875 = vunpack.c.l.b16 %v855
  %v876 = vunpack.c.l.b16 %v856
  %v877 = vunpack.c.l.b16 %v857
  %v878 = vunpack.c.l.b16 %v858
  %v879 = vunpack.c.l.b16 %v859
  %v880 = vunpack.c.l.b16 %v860
  %v881 = vunpack.c.l.b16 %v861
  %v882 = vpack.c.b16 %v873, %v872
  %v883 = vpack.c.b16 %v875, %v874
  %v884 = vpack.c.b16 %v877, %v876
  %v885 = vpack.c.b16 %v879, %v878
  %v886 = vpack.c.b16 %v881, %v880
  %v893 = vsel %vm318, %v850, 0
  %895 = vmatprep.subr.bf16.mxu0 0
  %896 = vmatpush1.bf16.msra.mxu0 %v882
  %897 = vmatprep.subr.bf16.mxu0 0
  %898 = vmatpush1.bf16.msra.mxu0 %v883
  %899 = vmatprep.subr.bf16.mxu0 0
  %900 = vmatpush1.bf16.msra.mxu0 %v884
  %901 = vmatprep.subr.bf16.mxu0 0
  %902 = vmatpush1.bf16.msra.mxu0 %v885
  %903 = vmatprep.subr.bf16.mxu0 0
  %904 = vmatpush1.bf16.msra.mxu0 %v886
  %905 = vmatprep.subr.bf16.mxu0 0
  %906 = vmatpush1.bf16.msra.mxu0 0
  %907 = vmatprep.subr.bf16.mxu0 0
  %908 = vmatpush1.bf16.msra.mxu0 0
  %909 = vmatprep.subr.bf16.mxu0 0
  %910 = vmatpush1.bf16.msra.mxu0 0
  %911 = vmatprep.subr.bf16.mxu0 0
  %912 = vmatpush1.bf16.msra.mxu0 0
  %913 = vmatprep.subr.bf16.mxu0 0
  %914 = vmatpush1.bf16.msra.mxu0 0
  %915 = vmatprep.subr.bf16.mxu0 0
  %916 = vmatpush1.bf16.msra.mxu0 0
  %917 = vmatprep.subr.bf16.mxu0 0
  %918 = vmatpush1.bf16.msra.mxu0 0
  %919 = vmatprep.subr.bf16.mxu0 0
  %920 = vmatpush1.bf16.msra.mxu0 0
  %921 = vmatprep.subr.bf16.mxu0 0
  %922 = vmatpush1.bf16.msra.mxu0 0
  %923 = vmatprep.subr.bf16.mxu0 0
  %924 = vmatpush1.bf16.msra.mxu0 0
  %925 = vmatprep.subr.bf16.mxu0 0
  %926 = vmatpush1.bf16.msra.mxu0 0
  %927 = vmatprep.mubr.bf16.mxu0 0
  %928 = vmatmul.mubr.bf16.gmra.mrb[0].mxu0 %v893
  %v929 = vpop.f32.mrb[0].mxu0
  %v930 = vadd.f32 0.0, %v929
  %v931 = vpop.f32.mrb[0].mxu0
  %v932 = vpop.f32.mrb[0].mxu0
  %v933 = vadd.f32 0.0, %v932
  %v934 = vpop.f32.mrb[0].mxu0
  %935 = vdwg.mxu0
  %v946 = vunpack.c.l.b16 %v838
  %v947 = vunpack.c.l.b16 %v839
  %v948 = vunpack.c.l.b16 %v840
  %v949 = vunpack.c.l.b16 %v841
  %v950 = vunpack.c.l.b16 %v842
  %v951 = vunpack.c.l.b16 %v843
  %v952 = vunpack.c.l.b16 %v844
  %v953 = vunpack.c.l.b16 %v845
  %v954 = vunpack.c.l.b16 %v846
  %v955 = vunpack.c.l.b16 %v847
  %v956 = vpack.c.b16 %v947, %v946
  %v957 = vpack.c.b16 %v949, %v948
  %v958 = vpack.c.b16 %v951, %v950
  %v959 = vpack.c.b16 %v953, %v952
  %v960 = vpack.c.b16 %v955, %v954
  %v967 = vsel %vm318, %v837, 0
  %969 = vmatprep.subr.bf16.mxu0 0
  %970 = vmatpush1.bf16.msra.mxu0 %v956
  %971 = vmatprep.subr.bf16.mxu0 0
  %972 = vmatpush1.bf16.msra.mxu0 %v957
  %973 = vmatprep.subr.bf16.mxu0 0
  %974 = vmatpush1.bf16.msra.mxu0 %v958
  %975 = vmatprep.subr.bf16.mxu0 0
  %976 = vmatpush1.bf16.msra.mxu0 %v959
  %977 = vmatprep.subr.bf16.mxu0 0
  %978 = vmatpush1.bf16.msra.mxu0 %v960
  %979 = vmatprep.subr.bf16.mxu0 0
  %980 = vmatpush1.bf16.msra.mxu0 0
  %981 = vmatprep.subr.bf16.mxu0 0
  %982 = vmatpush1.bf16.msra.mxu0 0
  %983 = vmatprep.subr.bf16.mxu0 0
  %984 = vmatpush1.bf16.msra.mxu0 0
  %985 = vmatprep.subr.bf16.mxu0 0
  %986 = vmatpush1.bf16.msra.mxu0 0
  %987 = vmatprep.subr.bf16.mxu0 0
  %988 = vmatpush1.bf16.msra.mxu0 0
  %989 = vmatprep.subr.bf16.mxu0 0
  %990 = vmatpush1.bf16.msra.mxu0 0
  %991 = vmatprep.subr.bf16.mxu0 0
  %992 = vmatpush1.bf16.msra.mxu0 0
  %993 = vmatprep.subr.bf16.mxu0 0
  %994 = vmatpush1.bf16.msra.mxu0 0
  %995 = vmatprep.subr.bf16.mxu0 0
  %996 = vmatpush1.bf16.msra.mxu0 0
  %997 = vmatprep.subr.bf16.mxu0 0
  %998 = vmatpush1.bf16.msra.mxu0 0
  %999 = vmatprep.subr.bf16.mxu0 0
  %1000 = vmatpush1.bf16.msra.mxu0 0
  %1001 = vmatprep.mubr.bf16.mxu0 0
  %1002 = vmatmul.mubr.bf16.gmra.mrb[0].mxu0 %v967
  %v1003 = vpop.f32.mrb[0].mxu0
  %v1004 = vadd.f32 %v930, %v1003
  %v1005 = vpop.f32.mrb[0].mxu0
  %v1006 = vpop.f32.mrb[0].mxu0
  %v1007 = vadd.f32 %v933, %v1006
  %v1008 = vpop.f32.mrb[0].mxu0
  %1009 = vdwg.mxu0
  %v1010 = vld [vmem:[#allocation3 + $0x2] sm:$0xff]
  %v1011 = vld [vmem:[#allocation3 + $0x12] sm:$0xff]
  %v1012 = vpack.c.bf16 %v1011, %v1010
  %s1013 = scalar_lea.vmem %s4, 80
  %v1014 = vld [vmem:[%s1013] sm:$0xf]
  %v1015 = vld [vmem:[%s1013 + $0x4] sm:$0xf]
  %v1016 = vld [vmem:[%s1013 + $0x8] sm:$0xf]
  %v1017 = vld [vmem:[%s1013 + $0xc] sm:$0xf]
  %v1018 = vld [vmem:[%s1013 + $0x10] sm:$0xf]
  %v1019 = vld [vmem:[%s1013 + $0x14] sm:$0xf]
  %v1020 = vld [vmem:[%s1013 + $0x18] sm:$0xf]
  %v1021 = vld [vmem:[%s1013 + $0x1c] sm:$0xf]
  %v1022 = vld [vmem:[%s1013 + $0x20] sm:$0xf]
  %v1023 = vld [vmem:[%s1013 + $0x24] sm:$0xf]
  %v1034 = vunpack.c.l.b16 %v1014
  %v1035 = vunpack.c.l.b16 %v1015
  %v1036 = vunpack.c.l.b16 %v1016
  %v1037 = vunpack.c.l.b16 %v1017
  %v1038 = vunpack.c.l.b16 %v1018
  %v1039 = vunpack.c.l.b16 %v1019
  %v1040 = vunpack.c.l.b16 %v1020
  %v1041 = vunpack.c.l.b16 %v1021
  %v1042 = vunpack.c.l.b16 %v1022
  %v1043 = vunpack.c.l.b16 %v1023
  %v1044 = vpack.c.b16 %v1035, %v1034
  %v1045 = vpack.c.b16 %v1037, %v1036
  %v1046 = vpack.c.b16 %v1039, %v1038
  %v1047 = vpack.c.b16 %v1041, %v1040
  %v1048 = vpack.c.b16 %v1043, %v1042
  %v1055 = vsel %vm318, %v1012, 0
  %1057 = vmatprep.subr.bf16.mxu0 0
  %1058 = vmatpush1.bf16.msra.mxu0 %v1044
  %1059 = vmatprep.subr.bf16.mxu0 0
  %1060 = vmatpush1.bf16.msra.mxu0 %v1045
  %1061 = vmatprep.subr.bf16.mxu0 0
  %1062 = vmatpush1.bf16.msra.mxu0 %v1046
  %1063 = vmatprep.subr.bf16.mxu0 0
  %1064 = vmatpush1.bf16.msra.mxu0 %v1047
  %1065 = vmatprep.subr.bf16.mxu0 0
  %1066 = vmatpush1.bf16.msra.mxu0 %v1048
  %1067 = vmatprep.subr.bf16.mxu0 0
  %1068 = vmatpush1.bf16.msra.mxu0 0
  %1069 = vmatprep.subr.bf16.mxu0 0
  %1070 = vmatpush1.bf16.msra.mxu0 0
  %1071 = vmatprep.subr.bf16.mxu0 0
  %1072 = vmatpush1.bf16.msra.mxu0 0
  %1073 = vmatprep.subr.bf16.mxu0 0
  %1074 = vmatpush1.bf16.msra.mxu0 0
  %1075 = vmatprep.subr.bf16.mxu0 0
  %1076 = vmatpush1.bf16.msra.mxu0 0
  %1077 = vmatprep.subr.bf16.mxu0 0
  %1078 = vmatpush1.bf16.msra.mxu0 0
  %1079 = vmatprep.subr.bf16.mxu0 0
  %1080 = vmatpush1.bf16.msra.mxu0 0
  %1081 = vmatprep.subr.bf16.mxu0 0
  %1082 = vmatpush1.bf16.msra.mxu0 0
  %1083 = vmatprep.subr.bf16.mxu0 0
  %1084 = vmatpush1.bf16.msra.mxu0 0
  %1085 = vmatprep.subr.bf16.mxu0 0
  %1086 = vmatpush1.bf16.msra.mxu0 0
  %1087 = vmatprep.subr.bf16.mxu0 0
  %1088 = vmatpush1.bf16.msra.mxu0 0
  %1089 = vmatprep.mubr.bf16.mxu0 0
  %1090 = vmatmul.mubr.bf16.gmra.mrb[0].mxu0 %v1055
  %v1091 = vpop.f32.mrb[0].mxu0
  %v1092 = vadd.f32 0.0, %v1091
  %v1093 = vpop.f32.mrb[0].mxu0
  %v1094 = vpop.f32.mrb[0].mxu0
  %v1095 = vadd.f32 0.0, %v1094
  %v1096 = vpop.f32.mrb[0].mxu0
  %1097 = vdwg.mxu0
  %v1098 = vadd.f32 %v1004, %v1092
  %v1099 = vadd.f32 %v1007, %v1095
  %v1100 = vld [vmem:[%s7] sm:$0xff]
  %v1101 = vld [vmem:[%s7 + $0x8] sm:$0xff]
  %v1102 = vld [vmem:[%s7 + $0x10] sm:$0xff]
  %v1103 = vld [vmem:[%s7 + $0x18] sm:$0xff]
  %v1104 = vld [vmem:[%s7 + $0x20] sm:$0xff]
  %v1105 = vld [vmem:[%s7 + $0x28] sm:$0xff]
  %v1106 = vld [vmem:[%s7 + $0x30] sm:$0xff]
  %v1107 = vld [vmem:[%s7 + $0x38] sm:$0xff]
  %v1109 = vsel %vm535, %v1098, 0
  %v1112 = vsel %vm535, %v1099, 0
  %1114 = vmatprep.subr.mxu0 0.0
  %1115 = vmatpush1.msra.mxu0 %v1100
  %1116 = vmatprep.subr.mxu0 0.0
  %1117 = vmatpush1.msra.mxu0 %v1101
  %1118 = vmatprep.subr.mxu0 0.0
  %1119 = vmatpush1.msra.mxu0 %v1102
  %1120 = vmatprep.subr.mxu0 0.0
  %1121 = vmatpush1.msra.mxu0 %v1103
  %1122 = vmatprep.subr.mxu0 0.0
  %1123 = vmatpush1.msra.mxu0 %v1104
  %1124 = vmatprep.subr.mxu0 0.0
  %1125 = vmatpush1.msra.mxu0 %v1105
  %1126 = vmatprep.subr.mxu0 0.0
  %1127 = vmatpush1.msra.mxu0 %v1106
  %1128 = vmatprep.subr.mxu0 0.0
  %1129 = vmatpush1.msra.mxu0 %v1107
  %1130 = vmatprep.subr.mxu0 0.0
  %1131 = vmatpush1.msra.mxu0 0.0
  %1132 = vmatprep.subr.mxu0 0.0
  %1133 = vmatpush1.msra.mxu0 0.0
  %1134 = vmatprep.subr.mxu0 0.0
  %1135 = vmatpush1.msra.mxu0 0.0
  %1136 = vmatprep.subr.mxu0 0.0
  %1137 = vmatpush1.msra.mxu0 0.0
  %1138 = vmatprep.subr.mxu0 0.0
  %1139 = vmatpush1.msra.mxu0 0.0
  %1140 = vmatprep.subr.mxu0 0.0
  %1141 = vmatpush1.msra.mxu0 0.0
  %1142 = vmatprep.subr.mxu0 0.0
  %1143 = vmatpush1.msra.mxu0 0.0
  %1144 = vmatprep.subr.mxu0 0.0
  %1145 = vmatpush1.msra.mxu0 0.0
  %1146 = vmatprep.subr.mxu0 0.0
  %1147 = vmatpush1.msra.mxu0 0.0
  %1148 = vmatprep.subr.mxu0 0.0
  %1149 = vmatpush1.msra.mxu0 0.0
  %1150 = vmatprep.subr.mxu0 0.0
  %1151 = vmatpush1.msra.mxu0 0.0
  %1152 = vmatprep.subr.mxu0 0.0
  %1153 = vmatpush1.msra.mxu0 0.0
  %1154 = vmatprep.subr.mxu0 0.0
  %1155 = vmatpush1.msra.mxu0 0.0
  %1156 = vmatprep.subr.mxu0 0.0
  %1157 = vmatpush1.msra.mxu0 0.0
  %1158 = vmatprep.subr.mxu0 0.0
  %1159 = vmatpush1.msra.mxu0 0.0
  %1160 = vmatprep.subr.mxu0 0.0
  %1161 = vmatpush1.msra.mxu0 0.0
  %1162 = vmatprep.subr.mxu0 0.0
  %1163 = vmatpush1.msra.mxu0 0.0
  %1164 = vmatprep.subr.mxu0 0.0
  %1165 = vmatpush1.msra.mxu0 0.0
  %1166 = vmatprep.subr.mxu0 0.0
  %1167 = vmatpush1.msra.mxu0 0.0
  %1168 = vmatprep.subr.mxu0 0.0
  %1169 = vmatpush1.msra.mxu0 0.0
  %1170 = vmatprep.subr.mxu0 0.0
  %1171 = vmatpush1.msra.mxu0 0.0
  %1172 = vmatprep.subr.mxu0 0.0
  %1173 = vmatpush1.msra.mxu0 0.0
  %1174 = vmatprep.subr.mxu0 0.0
  %1175 = vmatpush1.msra.mxu0 0.0
  %1176 = vmatprep.subr.mxu0 0.0
  %1177 = vmatpush1.msra.mxu0 0.0
  %1178 = vmatprep.mubr.f32.mxu0 0.0
  %1179 = vmatmul.mubr.f32.gmra.mrb[0].mxu0 %v1109
  %v1180 = vpop.f32.mrb[0].mxu0
  %v1181 = vadd.f32 0.0, %v1180
  %v1182 = vpop.f32.mrb[0].mxu0
  %1183 = vmatprep.mubr.f32.mxu0 0.0
  %1184 = vmatmul.mubr.f32.gmra.mrb[0].mxu0 %v1112
  %v1185 = vpop.f32.mrb[0].mxu0
  %v1186 = vadd.f32 0.0, %v1185
  %v1187 = vpop.f32.mrb[0].mxu0
  %1188 = vdwg.mxu0
  %v1189 = vsel %vm195, %v1181, 0.0
  %v1190 = vsel %vm195, %v1186, 0.0
  %v1191 = vadd.f32 %v1189, %v1190
  %v1192 = vrot.slane %v1191, 4
  %v1193 = vadd.f32 %v1191, %v1192
  %v1194 = vrot.slane %v1193, 2
  %v1195 = vadd.f32 %v1193, %v1194
  %v1196 = vrot.slane %v1195, 1
  %v1197 = vadd.f32 %v1195, %v1196
  %v1198 = vmul.f32 %v1197, 0.0078125
  %1200 = vrot.lane.b32.xlu0 %v1198, 8
  %v1201 = vpop.permute.xlu0 %1200
  %1203 = vrot.lane.b32.xlu0 %v1198, 16
  %v1204 = vpop.permute.xlu0 %1203
  %1206 = vrot.lane.b32.xlu0 %v1198, 24
  %v1207 = vpop.permute.xlu0 %1206
  %1209 = vrot.lane.b32.xlu0 %v1198, 32
  %v1210 = vpop.permute.xlu0 %1209
  %1212 = vrot.lane.b32.xlu0 %v1198, 40
  %v1213 = vpop.permute.xlu0 %1212
  %1215 = vrot.lane.b32.xlu0 %v1198, 48
  %v1216 = vpop.permute.xlu0 %1215
  %1218 = vrot.lane.b32.xlu0 %v1198, 56
  %v1219 = vpop.permute.xlu0 %1218
  %v1221 = vsel %vm195, %v1198, %v1201
  %v1222 = vsel %vm650, %v1221, %v1204
  %v1223 = vsel %vm652, %v1222, %v1207
  %v1224 = vsel %vm654, %v1223, %v1210
  %v1225 = vsel %vm656, %v1224, %v1213
  %v1226 = vsel %vm658, %v1225, %v1216
  %v1227 = vsel %vm660, %v1226, %v1219
  %v1228 = vlaneseq
  %v1229 = vshrl.u32 %v1228, 7
  %v1230 = vsub.s32 0, %v1229
  %v1231 = vrot.slane %v1227, %v1230
  %v1232 = vsub.f32 %v1098, %v1231
  %v1233 = vsub.f32 %v1099, %v1231
  %v1234 = vmul.f32 %v1232, %v1232
  %v1235 = vmul.f32 %v1233, %v1233
  %v1237 = vsel %vm535, %v1234, 0
  %v1240 = vsel %vm535, %v1235, 0
  %1242 = vmatprep.subr.mxu0 0.0
  %1243 = vmatpush1.msra.mxu0 %v1100
  %1244 = vmatprep.subr.mxu0 0.0
  %1245 = vmatpush1.msra.mxu0 %v1101
  %1246 = vmatprep.subr.mxu0 0.0
  %1247 = vmatpush1.msra.mxu0 %v1102
  %1248 = vmatprep.subr.mxu0 0.0
  %1249 = vmatpush1.msra.mxu0 %v1103
  %1250 = vmatprep.subr.mxu0 0.0
  %1251 = vmatpush1.msra.mxu0 %v1104
  %1252 = vmatprep.subr.mxu0 0.0
  %1253 = vmatpush1.msra.mxu0 %v1105
  %1254 = vmatprep.subr.mxu0 0.0
  %1255 = vmatpush1.msra.mxu0 %v1106
  %1256 = vmatprep.subr.mxu0 0.0
  %1257 = vmatpush1.msra.mxu0 %v1107
  %1258 = vmatprep.subr.mxu0 0.0
  %1259 = vmatpush1.msra.mxu0 0.0
  %1260 = vmatprep.subr.mxu0 0.0
  %1261 = vmatpush1.msra.mxu0 0.0
  %1262 = vmatprep.subr.mxu0 0.0
  %1263 = vmatpush1.msra.mxu0 0.0
  %1264 = vmatprep.subr.mxu0 0.0
  %1265 = vmatpush1.msra.mxu0 0.0
  %1266 = vmatprep.subr.mxu0 0.0
  %1267 = vmatpush1.msra.mxu0 0.0
  %1268 = vmatprep.subr.mxu0 0.0
  %1269 = vmatpush1.msra.mxu0 0.0
  %1270 = vmatprep.subr.mxu0 0.0
  %1271 = vmatpush1.msra.mxu0 0.0
  %1272 = vmatprep.subr.mxu0 0.0
  %1273 = vmatpush1.msra.mxu0 0.0
  %1274 = vmatprep.subr.mxu0 0.0
  %1275 = vmatpush1.msra.mxu0 0.0
  %1276 = vmatprep.subr.mxu0 0.0
  %1277 = vmatpush1.msra.mxu0 0.0
  %1278 = vmatprep.subr.mxu0 0.0
  %1279 = vmatpush1.msra.mxu0 0.0
  %1280 = vmatprep.subr.mxu0 0.0
  %1281 = vmatpush1.msra.mxu0 0.0
  %1282 = vmatprep.subr.mxu0 0.0
  %1283 = vmatpush1.msra.mxu0 0.0
  %1284 = vmatprep.subr.mxu0 0.0
  %1285 = vmatpush1.msra.mxu0 0.0
  %1286 = vmatprep.subr.mxu0 0.0
  %1287 = vmatpush1.msra.mxu0 0.0
  %1288 = vmatprep.subr.mxu0 0.0
  %1289 = vmatpush1.msra.mxu0 0.0
  %1290 = vmatprep.subr.mxu0 0.0
  %1291 = vmatpush1.msra.mxu0 0.0
  %1292 = vmatprep.subr.mxu0 0.0
  %1293 = vmatpush1.msra.mxu0 0.0
  %1294 = vmatprep.subr.mxu0 0.0
  %1295 = vmatpush1.msra.mxu0 0.0
  %1296 = vmatprep.subr.mxu0 0.0
  %1297 = vmatpush1.msra.mxu0 0.0
  %1298 = vmatprep.subr.mxu0 0.0
  %1299 = vmatpush1.msra.mxu0 0.0
  %1300 = vmatprep.subr.mxu0 0.0
  %1301 = vmatpush1.msra.mxu0 0.0
  %1302 = vmatprep.subr.mxu0 0.0
  %1303 = vmatpush1.msra.mxu0 0.0
  %1304 = vmatprep.subr.mxu0 0.0
  %1305 = vmatpush1.msra.mxu0 0.0
  %1306 = vmatprep.mubr.f32.mxu0 0.0
  %1307 = vmatmul.mubr.f32.gmra.mrb[0].mxu0 %v1237
  %v1308 = vpop.f32.mrb[0].mxu0
  %v1309 = vadd.f32 0.0, %v1308
  %v1310 = vpop.f32.mrb[0].mxu0
  %1311 = vmatprep.mubr.f32.mxu0 0.0
  %1312 = vmatmul.mubr.f32.gmra.mrb[0].mxu0 %v1240
  %v1313 = vpop.f32.mrb[0].mxu0
  %v1314 = vadd.f32 0.0, %v1313
  %v1315 = vpop.f32.mrb[0].mxu0
  %1316 = vdwg.mxu0
  %v1317 = vsel %vm195, %v1309, 0.0
  %v1318 = vsel %vm195, %v1314, 0.0
  %v1319 = vadd.f32 %v1317, %v1318
  %v1320 = vrot.slane %v1319, 4
  %v1321 = vadd.f32 %v1319, %v1320
  %v1322 = vrot.slane %v1321, 2
  %v1323 = vadd.f32 %v1321, %v1322
  %v1324 = vrot.slane %v1323, 1
  %v1325 = vadd.f32 %v1323, %v1324
  %v1326 = vmul.f32 %v1325, 0.0078125
  %v1327 = vld [vmem:[%s5] sm:$0x1]
  %v1328 = vadd.f32 %v1326, 1e-05
  %v1329 = vrsqrt.pop %v1328
  %v1330 = vmul.f32 %v1327, %v1329
  %v1332 = vlaneseq
  %v1333 = vshrl.u32 %v1332, 7
  %v1334 = vsub.s32 0, %v1333
  %v1335 = vrot.slane %v1330, %v1334
  %1336 = vrot.lane.b32.xlu0 %v1335, 8
  %v1337 = vpop.permute.xlu0 %1336
  %1339 = vrot.lane.b32.xlu0 %v1335, 16
  %v1340 = vpop.permute.xlu0 %1339
  %1342 = vrot.lane.b32.xlu0 %v1335, 24
  %v1343 = vpop.permute.xlu0 %1342
  %1345 = vrot.lane.b32.xlu0 %v1335, 32
  %v1346 = vpop.permute.xlu0 %1345
  %1348 = vrot.lane.b32.xlu0 %v1335, 40
  %v1349 = vpop.permute.xlu0 %1348
  %1351 = vrot.lane.b32.xlu0 %v1335, 48
  %v1352 = vpop.permute.xlu0 %1351
  %1354 = vrot.lane.b32.xlu0 %v1335, 56
  %v1355 = vpop.permute.xlu0 %1354
  %v1357 = vsel %vm195, %v1330, %v1337
  %v1358 = vsel %vm650, %v1357, %v1340
  %v1359 = vsel %vm652, %v1358, %v1343
  %v1360 = vsel %vm654, %v1359, %v1346
  %v1361 = vsel %vm656, %v1360, %v1349
  %v1362 = vsel %vm658, %v1361, %v1352
  %v1363 = vsel %vm660, %v1362, %v1355
  %v1364 = vlaneseq
  %v1365 = vshrl.u32 %v1364, 7
  %v1366 = vsub.s32 0, %v1365
  %v1367 = vrot.slane %v1363, %v1366
  %v1368 = vmul.f32 %v1232, %v1367
  %v1369 = vmul.f32 %v1233, %v1367
  %v1370 = vld [vmem:[%s6] sm:$0x1]
  %v1372 = vlaneseq
  %v1373 = vshrl.u32 %v1372, 7
  %v1374 = vsub.s32 0, %v1373
  %v1375 = vrot.slane %v1370, %v1374
  %v1377 = vadd.f32 %v1368, %v1375
  %v1378 = vadd.f32 %v1369, %v1375
  %v1379 = vmax.f32 %v1377, 0.0
  %v1380 = vmax.f32 %v1378, 0.0
  %1381 = vst.msk [vmem:[%s8] sm:$0xff] %vm535, %v1379
  %1382 = vst.msk [vmem:[%s8 + $0x8] sm:$0xff] %vm535, %v1380
  // Predicated region
  $region34: #{encoderblock_forward.1} parent=0 // pred_check
    _
  $region35: #{encoderblock_forward.1} parent=0 // pred_check_branch
    %1384 = sbr.rel (0) target = $region37
  $region36: #{encoderblock_forward.1} parent=0 // pred_region
    _
  $region37: #{encoderblock_forward.1} parent=0 // pred_fallthru
    _
  // Predicated region
  $region38: #{encoderblock_forward.1} parent=0 // pred_check
    _
  $region39: #{encoderblock_forward.1} parent=0 // pred_check_branch
    %1386 = sbr.rel (0) target = $region41
  $region40: #{encoderblock_forward.1} parent=0 // pred_region
    _
  $region41: #{encoderblock_forward.1} parent=0 // pred_fallthru
    _

</llo_original>
